<compile_context>
chip_gen: v6e
topology: v6e:2x2x1
jax: 0.10.0
libtpu: 0.0.40
codegen_flags: <defaults>
</compile_context>

<pallas_src>
import functools

import jax
import jax.numpy as jnp
from jax import lax
from jax.experimental import pallas as pl
from jax.experimental.pallas import tpu as pltpu

C_IN = 1102
C_MID = 64
C_OUT = 32
HALO_CTX = 8      # context rows stored per side (>= the 4 needed; 8 keeps
                  # the in-kernel slab concat sublane-aligned)
BN_EPS = 1e-5


def encoder_kernel(x_ref, halo_ref, w1_ref, b1_ref, w2_ref, b2_ref,
                   w3_ref, b3_ref, bn_scale_ref, bn_shift_ref,
                   w4_ref, b4_ref, out_ref, *, tile_rows, seq_len):
    t = pl.program_id(1)
    s = t * tile_rows                       # first global output row of tile

    xm = x_ref[0]                           # (T, 1102) bf16
    xl = halo_ref[0, 0, 0:HALO_CTX, :]      # (8, 1102) bf16, rows s-8 .. s-1
    xr = halo_ref[0, 0, HALO_CTX:, :]       # (8, 1102) bf16, rows s+T .. s+T+7

    # Shared row-validity machinery for global rows s-8 .. s+T+7.
    rows_ext = tile_rows + 2 * HALO_CTX
    g_ext = (s - HALO_CTX) + lax.broadcasted_iota(jnp.int32, (rows_ext, 1), 0)

    def keep(h, r0):
        # Zero rows whose global index (= g_ext[r0 + j]) is outside [0, L).
        gg = g_ext[r0:r0 + h.shape[0]]
        return jnp.where(jnp.logical_and(gg >= 0, gg < seq_len), h, 0.0)

    # ---- layer 1: Conv1d(1102 -> 64, k=3, pad=1) + ReLU -------------------
    # Single (T+16, 1102) @ (1102, 192) bf16 matmul; tap k lives in columns
    # [64k, 64k+64) and is combined with a row shift on the small f32 result.
    slab = jnp.concatenate([xl, xm, xr], axis=0)          # (T+16, 1102) bf16
    y = jnp.dot(slab, w1_ref[...], preferred_element_type=jnp.float32)
    # Zero rows outside [0, L): neutralizes garbage rows of a ragged last x
    # block and reproduces the sequence-end zero padding in one cheap select.
    y = keep(y, 0)

    n1 = tile_rows + 6                                    # rows s-3 .. s+T+2
    h = (y[4:4 + n1, 0:C_MID]
         + y[5:5 + n1, C_MID:2 * C_MID]
         + y[6:6 + n1, 2 * C_MID:3 * C_MID]
         + b1_ref[...])
    h = keep(jnp.maximum(h, 0.0), 5)

    # ---- layers 2..4: k=3 convs as three accumulating K=64 matmuls --------
    # (sublane-only input shifts; no lane-axis im2col concats.)
    def conv_k3(h_in, w_ref, b_ref):
        rows = h_in.shape[0] - 2
        hb = h_in.astype(jnp.bfloat16)
        acc = jnp.dot(hb[0:rows], w_ref[0], preferred_element_type=jnp.float32)
        acc = acc + jnp.dot(hb[1:rows + 1], w_ref[1],
                            preferred_element_type=jnp.float32)
        acc = acc + jnp.dot(hb[2:rows + 2], w_ref[2],
                            preferred_element_type=jnp.float32)
        return acc + b_ref[...]

    h = keep(jnp.maximum(conv_k3(h, w2_ref, b2_ref), 0.0), 6)   # rows s-2..s+T+1
    h = jnp.maximum(conv_k3(h, w3_ref, b3_ref), 0.0)            # rows s-1..s+T
    # BatchNorm1d(64), eval mode: running stats folded to scale/shift.
    h = keep(h * bn_scale_ref[...] + bn_shift_ref[...], 7)

    out = jnp.maximum(conv_k3(h, w4_ref, b4_ref), 0.0)          # (T, 32) f32
    # Dropout(0.2): identity in eval mode.
    out_ref[...] = out[None].astype(out_ref.dtype)


def encoder_forward(x, params, *, block_rows=512, out_dtype=jnp.bfloat16):
    (w1, b1, w2, b2, w3, b3, gamma, beta, rmean, rvar, w4, b4) = params
    B, L, cin = x.shape
    assert cin == C_IN, cin

    # Stream x in bf16 (halves the dominant HBM term).  Best end-to-end: keep
    # x stored in bf16 upstream, or let this cast fuse with x's producer
    # inside the same jit (a standalone f32->bf16 pass would cost more).
    xb = x if x.dtype == jnp.bfloat16 else x.astype(jnp.bfloat16)

    # Row tile: multiple of 8, clamped to the rounded-up sequence length.
    # Sweep 512-1024; keep B * n_t >= 2 (ideally even) for v7x megacore.
    tl = max(8, (block_rows // 8) * 8)
    tl = min(tl, pl.cdiv(L, 8) * 8)
    n_t = pl.cdiv(L, tl)

    # Per-tile halo context (8 rows each side), built with a small row gather
    # (~16/tl of x) -- no full-array zero-pad copy of x.  Rows outside [0, L)
    # are zeroed here; garbage rows of a ragged last x block are zeroed
    # in-kernel before they can touch the matmul result.
    starts = jnp.arange(n_t, dtype=jnp.int32) * tl
    offs = jnp.concatenate([jnp.arange(-HALO_CTX, 0, dtype=jnp.int32),
                            tl + jnp.arange(0, HALO_CTX, dtype=jnp.int32)])
    idx = starts[:, None] + offs[None, :]                      # (n_t, 16)
    in_range = jnp.logical_and(idx >= 0, idx < L)
    halo = jnp.take(xb, jnp.clip(idx, 0, L - 1).reshape(-1), axis=1)
    halo = jnp.where(in_range.reshape(1, n_t * 2 * HALO_CTX, 1), halo, 0)
    halo = halo.reshape(B, n_t, 2 * HALO_CTX, C_IN)

    # Weights: bf16 for the MXU.  Layer-1 taps packed into 64-wide column
    # groups of one (1102, 192) matrix; layers 2-4 stay per-tap (3, 64, Cout)
    # for the accumulate-matmul formulation.
    w1p = jnp.transpose(w1, (1, 0, 2)).reshape(C_IN, 3 * C_MID).astype(jnp.bfloat16)
    w2b = w2.astype(jnp.bfloat16)
    w3b = w3.astype(jnp.bfloat16)
    w4b = w4.astype(jnp.bfloat16)
    # BatchNorm eval: fold running stats (no in-kernel rsqrt).
    bn_scale = gamma * lax.rsqrt(rvar + BN_EPS)
    bn_shift = beta - rmean * bn_scale

    rows_ext = tl + 2 * HALO_CTX
    flops = 2 * B * n_t * (rows_ext * C_IN * 3 * C_MID
                           + (2 * tl + 6) * 3 * C_MID * C_MID
                           + tl * 3 * C_MID * C_OUT)
    bytes_accessed = int(
        (xb.size + halo.size) * 2
        + (w1p.size + w2b.size + w3b.size + w4b.size) * 2
        + (b1.size + b2.size + b3.size + b4.size
           + bn_scale.size + bn_shift.size) * 4
        + B * L * C_OUT * jnp.dtype(out_dtype).itemsize)

    kernel = functools.partial(encoder_kernel, tile_rows=tl, seq_len=L)

    def wspec(shape):
        return pl.BlockSpec(shape, lambda b, t: (0,) * len(shape))

    out = pl.pallas_call(
        kernel,
        out_shape=jax.ShapeDtypeStruct((B, L, C_OUT), out_dtype),
        grid_spec=pltpu.PrefetchScalarGridSpec(
            num_scalar_prefetch=0,
            grid=(B, n_t),
            in_specs=[
                pl.BlockSpec((1, tl, C_IN), lambda b, t: (b, t, 0)),
                pl.BlockSpec((1, 1, 2 * HALO_CTX, C_IN),
                             lambda b, t: (b, t, 0, 0)),
                wspec((C_IN, 3 * C_MID)),     # w1 packed (VMEM resident)
                wspec((1, C_MID)),            # b1
                wspec((3, C_MID, C_MID)),     # w2 per-tap
                wspec((1, C_MID)),            # b2
                wspec((3, C_MID, C_MID)),     # w3 per-tap
                wspec((1, C_MID)),            # b3
                wspec((1, C_MID)),            # bn scale
                wspec((1, C_MID)),            # bn shift
                wspec((3, C_MID, C_OUT)),     # w4 per-tap
                wspec((1, C_OUT)),            # b4
            ],
            out_specs=pl.BlockSpec((1, tl, C_OUT), lambda b, t: (b, t, 0)),
        ),
        compiler_params=pltpu.CompilerParams(
            dimension_semantics=("parallel", "parallel"),
            vmem_limit_bytes=48 * 1024 * 1024),
        cost_estimate=pl.CostEstimate(
            flops=flops, transcendentals=0, bytes_accessed=bytes_accessed),
    )(xb, halo, w1p, b1, w2b, b2, w3b, b3, bn_scale, bn_shift, w4b, b4)

    return out                              # (B, L, 32), channels-last


def encoder_reference(x, params, matmul_dtype=jnp.float32):
    """Pure-JAX reference (lax.conv).  matmul_dtype=bf16 mirrors the kernel's
    operand precision (f32 accumulation) for a tight correctness check."""
    (w1, b1, w2, b2, w3, b3, gamma, beta, rmean, rvar, w4, b4) = params

    def conv_relu(h, w, b):
        y = lax.conv_general_dilated(
            h.astype(matmul_dtype), w.astype(matmul_dtype),
            window_strides=(1,), padding=((1, 1),),
            dimension_numbers=('NWC', 'WIO', 'NWC'),
            preferred_element_type=jnp.float32)
        return jnp.maximum(y + b[None], 0.0)

    h = conv_relu(x, w1, b1)
    h = conv_relu(h, w2, b2)
    h = conv_relu(h, w3, b3)
    h = (h - rmean[None]) * (gamma[None] * lax.rsqrt(rvar[None] + BN_EPS)) \
        + beta[None]
    h = conv_relu(h, w4, b4)
    return h


def init_params(key):
    ks = jax.random.split(key, 12)

    def w(k, kk, cin, cout, scale=0.05):
        return (scale * jax.random.normal(k, (kk, cin, cout))).astype(jnp.float32)

    def b(k, c):
        return (0.01 * jax.random.normal(k, (1, c))).astype(jnp.float32)

    w1 = w(ks[0], 3, C_IN, C_MID)
    b1 = b(ks[1], C_MID)
    w2 = w(ks[2], 3, C_MID, C_MID)
    b2 = b(ks[3], C_MID)
    w3 = w(ks[4], 3, C_MID, C_MID)
    b3 = b(ks[5], C_MID)
    gamma = (1.0 + 0.1 * jax.random.normal(ks[6], (1, C_MID))).astype(jnp.float32)
    beta = (0.1 * jax.random.normal(ks[7], (1, C_MID))).astype(jnp.float32)
    rmean = (0.1 * jax.random.normal(ks[8], (1, C_MID))).astype(jnp.float32)
    rvar = (1.0 + 0.1 * jnp.abs(jax.random.normal(ks[9], (1, C_MID)))).astype(jnp.float32)
    w4 = w(ks[10], 3, C_MID, C_OUT)
    b4 = b(ks[11], C_OUT)
    return (w1, b1, w2, b2, w3, b3, gamma, beta, rmean, rvar, w4, b4)


if __name__ == "__main__":
    key = jax.random.PRNGKey(0)
    k_x, k_p = jax.random.split(key)
    params = init_params(k_p)

    fwd = jax.jit(encoder_forward, static_argnames=("block_rows", "out_dtype"))

    # Two small configs: row tile divides L, and a ragged last tile.
    for (B, L, br) in [(2, 16, 8), (1, 19, 8)]:
        x = jax.random.normal(k_x, (B, L, C_IN), dtype=jnp.float32)

        out = jax.block_until_ready(fwd(x, params, block_rows=br))
        assert out.shape == (B, L, C_OUT), out.shape
        out32 = out.astype(jnp.float32)

        # Tight check vs a reference using the same bf16-operand / f32-accum
        # precision; looser check vs the full-f32 reference.
        ref_bf16 = jax.block_until_ready(encoder_reference(x, params, jnp.bfloat16))
        ref_f32 = jax.block_until_ready(encoder_reference(x, params, jnp.float32))
        assert jnp.allclose(out32, ref_bf16, atol=2e-2, rtol=2e-2), \
            (B, L, float(jnp.max(jnp.abs(out32 - ref_bf16))))
        assert jnp.allclose(out32, ref_f32, atol=1e-1, rtol=1e-1), \
            (B, L, float(jnp.max(jnp.abs(out32 - ref_f32))))

    print("KERNEL_OK")
</pallas_src>

<mosaic_0001>
module attributes {stable_mosaic.version = 11 : i64} {
  func.func @encoder_kernel(%arg0: i32, %arg1: i32, %arg2: memref<1x8x1102xbf16, #tpu.memory_space<vmem>>, %arg3: memref<1x1x16x1102xbf16, #tpu.memory_space<vmem>>, %arg4: memref<1102x192xbf16, #tpu.memory_space<vmem>>, %arg5: memref<1x64xf32, #tpu.memory_space<vmem>>, %arg6: memref<3x64x64xbf16, #tpu.memory_space<vmem>>, %arg7: memref<1x64xf32, #tpu.memory_space<vmem>>, %arg8: memref<3x64x64xbf16, #tpu.memory_space<vmem>>, %arg9: memref<1x64xf32, #tpu.memory_space<vmem>>, %arg10: memref<1x64xf32, #tpu.memory_space<vmem>>, %arg11: memref<1x64xf32, #tpu.memory_space<vmem>>, %arg12: memref<3x64x32xbf16, #tpu.memory_space<vmem>>, %arg13: memref<1x32xf32, #tpu.memory_space<vmem>>, %arg14: memref<1x8x32xbf16, #tpu.memory_space<vmem>>) attributes {dimension_semantics = [#tpu.dimension_semantics<parallel>, #tpu.dimension_semantics<parallel>], iteration_bounds = array<i64: 2, 2>, scalar_prefetch = 0 : i64, scratch_operands = 0 : i64, tpu.core_type = #tpu.core_type<tc>, window_params = [{transform_indices = @transform_0, window_bounds = array<i64: 1, 8, 1102>}, {transform_indices = @transform_1, window_bounds = array<i64: 1, 1, 16, 1102>}, {pipeline_mode = #tpu.pipeline_mode<synchronous>, transform_indices = @transform_2, window_bounds = array<i64: 1102, 192>}, {pipeline_mode = #tpu.pipeline_mode<synchronous>, transform_indices = @transform_3, window_bounds = array<i64: 1, 64>}, {pipeline_mode = #tpu.pipeline_mode<synchronous>, transform_indices = @transform_4, window_bounds = array<i64: 3, 64, 64>}, {pipeline_mode = #tpu.pipeline_mode<synchronous>, transform_indices = @transform_5, window_bounds = array<i64: 1, 64>}, {pipeline_mode = #tpu.pipeline_mode<synchronous>, transform_indices = @transform_6, window_bounds = array<i64: 3, 64, 64>}, {pipeline_mode = #tpu.pipeline_mode<synchronous>, transform_indices = @transform_7, window_bounds = array<i64: 1, 64>}, {pipeline_mode = #tpu.pipeline_mode<synchronous>, transform_indices = @transform_8, window_bounds = array<i64: 1, 64>}, {pipeline_mode = #tpu.pipeline_mode<synchronous>, transform_indices = @transform_9, window_bounds = array<i64: 1, 64>}, {pipeline_mode = #tpu.pipeline_mode<synchronous>, transform_indices = @transform_10, window_bounds = array<i64: 3, 64, 32>}, {pipeline_mode = #tpu.pipeline_mode<synchronous>, transform_indices = @transform_11, window_bounds = array<i64: 1, 32>}, {transform_indices = @transform_12, window_bounds = array<i64: 1, 8, 32>}]} {
    %c8_i32 = arith.constant 8 : i32
    %0 = arith.muli %arg1, %c8_i32 : i32
    %c0 = arith.constant 0 : index
    %c0_0 = arith.constant 0 : index
    %c0_1 = arith.constant 0 : index
    %1 = vector.load %arg2[%c0, %c0_0, %c0_1] : memref<1x8x1102xbf16, #tpu.memory_space<vmem>>, vector<1x8x1102xbf16>
    %2 = vector.shape_cast %1 : vector<1x8x1102xbf16> to vector<8x1102xbf16>
    %c0_2 = arith.constant 0 : index
    %c0_3 = arith.constant 0 : index
    %c0_4 = arith.constant 0 : index
    %c0_5 = arith.constant 0 : index
    %3 = vector.load %arg3[%c0_2, %c0_3, %c0_4, %c0_5] : memref<1x1x16x1102xbf16, #tpu.memory_space<vmem>>, vector<1x1x8x1102xbf16>
    %4 = vector.shape_cast %3 : vector<1x1x8x1102xbf16> to vector<8x1102xbf16>
    %c0_6 = arith.constant 0 : index
    %c0_7 = arith.constant 0 : index
    %c8 = arith.constant 8 : index
    %c0_8 = arith.constant 0 : index
    %5 = vector.load %arg3[%c0_6, %c0_7, %c8, %c0_8] : memref<1x1x16x1102xbf16, #tpu.memory_space<vmem>>, vector<1x1x8x1102xbf16>
    %6 = vector.shape_cast %5 : vector<1x1x8x1102xbf16> to vector<8x1102xbf16>
    %c8_i32_9 = arith.constant 8 : i32
    %7 = arith.subi %0, %c8_i32_9 : i32
    %8 = tpu.iota {dimensions = array<i32: 0>} : vector<24x1xi32>
    %9 = vector.broadcast %7 : i32 to vector<24x1xi32>
    %10 = arith.addi %9, %8 : vector<24x1xi32>
    %11 = tpu.concatenate %4, %2, %6 in 0 : vector<8x1102xbf16>, vector<8x1102xbf16>, vector<8x1102xbf16> -> vector<24x1102xbf16>
    %c0_10 = arith.constant 0 : index
    %c0_11 = arith.constant 0 : index
    %12 = vector.load %arg4[%c0_10, %c0_11] : memref<1102x192xbf16, #tpu.memory_space<vmem>>, vector<1102x192xbf16>
    %cst = arith.constant dense<0.000000e+00> : vector<24x192xf32>
    %13 = tpu.matmul %11, %12, %cst {dimension_numbers = #tpu.dot_dimension_numbers<[1], [0], [0], [1], [0, 0, 1, 1], [], []>} : vector<24x1102xbf16>, vector<1102x192xbf16>, vector<24x192xf32> -> vector<24x192xf32>
    %c0_i32 = arith.constant 0 : i32
    %14 = vector.broadcast %c0_i32 : i32 to vector<24x1xi32>
    %15 = arith.cmpi sge, %10, %14 : vector<24x1xi32>
    %c16_i32 = arith.constant 16 : i32
    %16 = vector.broadcast %c16_i32 : i32 to vector<24x1xi32>
    %17 = arith.cmpi slt, %10, %16 : vector<24x1xi32>
    %18 = arith.andi %15, %17 : vector<24x1xi1>
    %cst_12 = arith.constant 0.000000e+00 : f32
    %19 = vector.shape_cast %18 : vector<24x1xi1> to vector<24x1xi1>
    %20 = vector.broadcast %19 : vector<24x1xi1> to vector<24x192xi1>
    %21 = vector.broadcast %cst_12 : f32 to vector<24x192xf32>
    %22 = arith.select %20, %13, %21 : vector<24x192xi1>, vector<24x192xf32>
    %23 = vector.extract_strided_slice %22 {offsets = [4, 0], sizes = [14, 64], strides = [1, 1]} : vector<24x192xf32> to vector<14x64xf32>
    %24 = vector.extract_strided_slice %22 {offsets = [5, 64], sizes = [14, 64], strides = [1, 1]} : vector<24x192xf32> to vector<14x64xf32>
    %25 = arith.addf %23, %24 : vector<14x64xf32>
    %26 = vector.extract_strided_slice %22 {offsets = [6, 128], sizes = [14, 64], strides = [1, 1]} : vector<24x192xf32> to vector<14x64xf32>
    %27 = arith.addf %25, %26 : vector<14x64xf32>
    %c0_13 = arith.constant 0 : index
    %c0_14 = arith.constant 0 : index
    %28 = vector.load %arg5[%c0_13, %c0_14] : memref<1x64xf32, #tpu.memory_space<vmem>>, vector<1x64xf32>
    %29 = vector.broadcast %28 : vector<1x64xf32> to vector<14x64xf32>
    %30 = arith.addf %27, %29 : vector<14x64xf32>
    %cst_15 = arith.constant 0.000000e+00 : f32
    %31 = vector.broadcast %cst_15 : f32 to vector<14x64xf32>
    %32 = arith.maximumf %30, %31 : vector<14x64xf32>
    %33 = vector.extract_strided_slice %10 {offsets = [5, 0], sizes = [14, 1], strides = [1, 1]} : vector<24x1xi32> to vector<14x1xi32>
    %c0_i32_16 = arith.constant 0 : i32
    %34 = vector.broadcast %c0_i32_16 : i32 to vector<14x1xi32>
    %35 = arith.cmpi sge, %33, %34 : vector<14x1xi32>
    %c16_i32_17 = arith.constant 16 : i32
    %36 = vector.broadcast %c16_i32_17 : i32 to vector<14x1xi32>
    %37 = arith.cmpi slt, %33, %36 : vector<14x1xi32>
    %38 = arith.andi %35, %37 : vector<14x1xi1>
    %cst_18 = arith.constant 0.000000e+00 : f32
    %39 = vector.shape_cast %38 : vector<14x1xi1> to vector<14x1xi1>
    %40 = vector.broadcast %39 : vector<14x1xi1> to vector<14x64xi1>
    %41 = vector.broadcast %cst_18 : f32 to vector<14x64xf32>
    %42 = arith.select %40, %32, %41 : vector<14x64xi1>, vector<14x64xf32>
    %43 = arith.truncf %42 : vector<14x64xf32> to vector<14x64xbf16>
    %44 = vector.extract_strided_slice %43 {offsets = [0, 0], sizes = [12, 64], strides = [1, 1]} : vector<14x64xbf16> to vector<12x64xbf16>
    %c0_19 = arith.constant 0 : index
    %c0_20 = arith.constant 0 : index
    %c0_21 = arith.constant 0 : index
    %45 = vector.load %arg6[%c0_19, %c0_20, %c0_21] : memref<3x64x64xbf16, #tpu.memory_space<vmem>>, vector<1x64x64xbf16>
    %46 = vector.shape_cast %45 : vector<1x64x64xbf16> to vector<64x64xbf16>
    %cst_22 = arith.constant dense<0.000000e+00> : vector<12x64xf32>
    %47 = tpu.matmul %44, %46, %cst_22 {dimension_numbers = #tpu.dot_dimension_numbers<[1], [0], [0], [1], [0, 0, 1, 1], [], []>} : vector<12x64xbf16>, vector<64x64xbf16>, vector<12x64xf32> -> vector<12x64xf32>
    %48 = vector.extract_strided_slice %43 {offsets = [1, 0], sizes = [12, 64], strides = [1, 1]} : vector<14x64xbf16> to vector<12x64xbf16>
    %c1 = arith.constant 1 : index
    %c0_23 = arith.constant 0 : index
    %c0_24 = arith.constant 0 : index
    %49 = vector.load %arg6[%c1, %c0_23, %c0_24] : memref<3x64x64xbf16, #tpu.memory_space<vmem>>, vector<1x64x64xbf16>
    %50 = vector.shape_cast %49 : vector<1x64x64xbf16> to vector<64x64xbf16>
    %cst_25 = arith.constant dense<0.000000e+00> : vector<12x64xf32>
    %51 = tpu.matmul %48, %50, %cst_25 {dimension_numbers = #tpu.dot_dimension_numbers<[1], [0], [0], [1], [0, 0, 1, 1], [], []>} : vector<12x64xbf16>, vector<64x64xbf16>, vector<12x64xf32> -> vector<12x64xf32>
    %52 = arith.addf %47, %51 : vector<12x64xf32>
    %53 = vector.extract_strided_slice %43 {offsets = [2, 0], sizes = [12, 64], strides = [1, 1]} : vector<14x64xbf16> to vector<12x64xbf16>
    %c2 = arith.constant 2 : index
    %c0_26 = arith.constant 0 : index
    %c0_27 = arith.constant 0 : index
    %54 = vector.load %arg6[%c2, %c0_26, %c0_27] : memref<3x64x64xbf16, #tpu.memory_space<vmem>>, vector<1x64x64xbf16>
    %55 = vector.shape_cast %54 : vector<1x64x64xbf16> to vector<64x64xbf16>
    %cst_28 = arith.constant dense<0.000000e+00> : vector<12x64xf32>
    %56 = tpu.matmul %53, %55, %cst_28 {dimension_numbers = #tpu.dot_dimension_numbers<[1], [0], [0], [1], [0, 0, 1, 1], [], []>} : vector<12x64xbf16>, vector<64x64xbf16>, vector<12x64xf32> -> vector<12x64xf32>
    %57 = arith.addf %52, %56 : vector<12x64xf32>
    %c0_29 = arith.constant 0 : index
    %c0_30 = arith.constant 0 : index
    %58 = vector.load %arg7[%c0_29, %c0_30] : memref<1x64xf32, #tpu.memory_space<vmem>>, vector<1x64xf32>
    %59 = vector.broadcast %58 : vector<1x64xf32> to vector<12x64xf32>
    %60 = arith.addf %57, %59 : vector<12x64xf32>
    %cst_31 = arith.constant 0.000000e+00 : f32
    %61 = vector.broadcast %cst_31 : f32 to vector<12x64xf32>
    %62 = arith.maximumf %60, %61 : vector<12x64xf32>
    %63 = vector.extract_strided_slice %10 {offsets = [6, 0], sizes = [12, 1], strides = [1, 1]} : vector<24x1xi32> to vector<12x1xi32>
    %c0_i32_32 = arith.constant 0 : i32
    %64 = vector.broadcast %c0_i32_32 : i32 to vector<12x1xi32>
    %65 = arith.cmpi sge, %63, %64 : vector<12x1xi32>
    %c16_i32_33 = arith.constant 16 : i32
    %66 = vector.broadcast %c16_i32_33 : i32 to vector<12x1xi32>
    %67 = arith.cmpi slt, %63, %66 : vector<12x1xi32>
    %68 = arith.andi %65, %67 : vector<12x1xi1>
    %cst_34 = arith.constant 0.000000e+00 : f32
    %69 = vector.shape_cast %68 : vector<12x1xi1> to vector<12x1xi1>
    %70 = vector.broadcast %69 : vector<12x1xi1> to vector<12x64xi1>
    %71 = vector.broadcast %cst_34 : f32 to vector<12x64xf32>
    %72 = arith.select %70, %62, %71 : vector<12x64xi1>, vector<12x64xf32>
    %73 = arith.truncf %72 : vector<12x64xf32> to vector<12x64xbf16>
    %74 = vector.extract_strided_slice %73 {offsets = [0, 0], sizes = [10, 64], strides = [1, 1]} : vector<12x64xbf16> to vector<10x64xbf16>
    %c0_35 = arith.constant 0 : index
    %c0_36 = arith.constant 0 : index
    %c0_37 = arith.constant 0 : index
    %75 = vector.load %arg8[%c0_35, %c0_36, %c0_37] : memref<3x64x64xbf16, #tpu.memory_space<vmem>>, vector<1x64x64xbf16>
    %76 = vector.shape_cast %75 : vector<1x64x64xbf16> to vector<64x64xbf16>
    %cst_38 = arith.constant dense<0.000000e+00> : vector<10x64xf32>
    %77 = tpu.matmul %74, %76, %cst_38 {dimension_numbers = #tpu.dot_dimension_numbers<[1], [0], [0], [1], [0, 0, 1, 1], [], []>} : vector<10x64xbf16>, vector<64x64xbf16>, vector<10x64xf32> -> vector<10x64xf32>
    %78 = vector.extract_strided_slice %73 {offsets = [1, 0], sizes = [10, 64], strides = [1, 1]} : vector<12x64xbf16> to vector<10x64xbf16>
    %c1_39 = arith.constant 1 : index
    %c0_40 = arith.constant 0 : index
    %c0_41 = arith.constant 0 : index
    %79 = vector.load %arg8[%c1_39, %c0_40, %c0_41] : memref<3x64x64xbf16, #tpu.memory_space<vmem>>, vector<1x64x64xbf16>
    %80 = vector.shape_cast %79 : vector<1x64x64xbf16> to vector<64x64xbf16>
    %cst_42 = arith.constant dense<0.000000e+00> : vector<10x64xf32>
    %81 = tpu.matmul %78, %80, %cst_42 {dimension_numbers = #tpu.dot_dimension_numbers<[1], [0], [0], [1], [0, 0, 1, 1], [], []>} : vector<10x64xbf16>, vector<64x64xbf16>, vector<10x64xf32> -> vector<10x64xf32>
    %82 = arith.addf %77, %81 : vector<10x64xf32>
    %83 = vector.extract_strided_slice %73 {offsets = [2, 0], sizes = [10, 64], strides = [1, 1]} : vector<12x64xbf16> to vector<10x64xbf16>
    %c2_43 = arith.constant 2 : index
    %c0_44 = arith.constant 0 : index
    %c0_45 = arith.constant 0 : index
    %84 = vector.load %arg8[%c2_43, %c0_44, %c0_45] : memref<3x64x64xbf16, #tpu.memory_space<vmem>>, vector<1x64x64xbf16>
    %85 = vector.shape_cast %84 : vector<1x64x64xbf16> to vector<64x64xbf16>
    %cst_46 = arith.constant dense<0.000000e+00> : vector<10x64xf32>
    %86 = tpu.matmul %83, %85, %cst_46 {dimension_numbers = #tpu.dot_dimension_numbers<[1], [0], [0], [1], [0, 0, 1, 1], [], []>} : vector<10x64xbf16>, vector<64x64xbf16>, vector<10x64xf32> -> vector<10x64xf32>
    %87 = arith.addf %82, %86 : vector<10x64xf32>
    %c0_47 = arith.constant 0 : index
    %c0_48 = arith.constant 0 : index
    %88 = vector.load %arg9[%c0_47, %c0_48] : memref<1x64xf32, #tpu.memory_space<vmem>>, vector<1x64xf32>
    %89 = vector.broadcast %88 : vector<1x64xf32> to vector<10x64xf32>
    %90 = arith.addf %87, %89 : vector<10x64xf32>
    %cst_49 = arith.constant 0.000000e+00 : f32
    %91 = vector.broadcast %cst_49 : f32 to vector<10x64xf32>
    %92 = arith.maximumf %90, %91 : vector<10x64xf32>
    %c0_50 = arith.constant 0 : index
    %c0_51 = arith.constant 0 : index
    %93 = vector.load %arg10[%c0_50, %c0_51] : memref<1x64xf32, #tpu.memory_space<vmem>>, vector<1x64xf32>
    %94 = vector.broadcast %93 : vector<1x64xf32> to vector<10x64xf32>
    %95 = arith.mulf %92, %94 : vector<10x64xf32>
    %c0_52 = arith.constant 0 : index
    %c0_53 = arith.constant 0 : index
    %96 = vector.load %arg11[%c0_52, %c0_53] : memref<1x64xf32, #tpu.memory_space<vmem>>, vector<1x64xf32>
    %97 = vector.broadcast %96 : vector<1x64xf32> to vector<10x64xf32>
    %98 = arith.addf %95, %97 : vector<10x64xf32>
    %99 = vector.extract_strided_slice %10 {offsets = [7, 0], sizes = [10, 1], strides = [1, 1]} : vector<24x1xi32> to vector<10x1xi32>
    %c0_i32_54 = arith.constant 0 : i32
    %100 = vector.broadcast %c0_i32_54 : i32 to vector<10x1xi32>
    %101 = arith.cmpi sge, %99, %100 : vector<10x1xi32>
    %c16_i32_55 = arith.constant 16 : i32
    %102 = vector.broadcast %c16_i32_55 : i32 to vector<10x1xi32>
    %103 = arith.cmpi slt, %99, %102 : vector<10x1xi32>
    %104 = arith.andi %101, %103 : vector<10x1xi1>
    %cst_56 = arith.constant 0.000000e+00 : f32
    %105 = vector.shape_cast %104 : vector<10x1xi1> to vector<10x1xi1>
    %106 = vector.broadcast %105 : vector<10x1xi1> to vector<10x64xi1>
    %107 = vector.broadcast %cst_56 : f32 to vector<10x64xf32>
    %108 = arith.select %106, %98, %107 : vector<10x64xi1>, vector<10x64xf32>
    %109 = arith.truncf %108 : vector<10x64xf32> to vector<10x64xbf16>
    %110 = vector.extract_strided_slice %109 {offsets = [0, 0], sizes = [8, 64], strides = [1, 1]} : vector<10x64xbf16> to vector<8x64xbf16>
    %c0_57 = arith.constant 0 : index
    %c0_58 = arith.constant 0 : index
    %c0_59 = arith.constant 0 : index
    %111 = vector.load %arg12[%c0_57, %c0_58, %c0_59] : memref<3x64x32xbf16, #tpu.memory_space<vmem>>, vector<1x64x32xbf16>
    %112 = vector.shape_cast %111 : vector<1x64x32xbf16> to vector<64x32xbf16>
    %cst_60 = arith.constant dense<0.000000e+00> : vector<8x32xf32>
    %113 = tpu.matmul %110, %112, %cst_60 {dimension_numbers = #tpu.dot_dimension_numbers<[1], [0], [0], [1], [0, 0, 1, 1], [], []>} : vector<8x64xbf16>, vector<64x32xbf16>, vector<8x32xf32> -> vector<8x32xf32>
    %114 = vector.extract_strided_slice %109 {offsets = [1, 0], sizes = [8, 64], strides = [1, 1]} : vector<10x64xbf16> to vector<8x64xbf16>
    %c1_61 = arith.constant 1 : index
    %c0_62 = arith.constant 0 : index
    %c0_63 = arith.constant 0 : index
    %115 = vector.load %arg12[%c1_61, %c0_62, %c0_63] : memref<3x64x32xbf16, #tpu.memory_space<vmem>>, vector<1x64x32xbf16>
    %116 = vector.shape_cast %115 : vector<1x64x32xbf16> to vector<64x32xbf16>
    %cst_64 = arith.constant dense<0.000000e+00> : vector<8x32xf32>
    %117 = tpu.matmul %114, %116, %cst_64 {dimension_numbers = #tpu.dot_dimension_numbers<[1], [0], [0], [1], [0, 0, 1, 1], [], []>} : vector<8x64xbf16>, vector<64x32xbf16>, vector<8x32xf32> -> vector<8x32xf32>
    %118 = arith.addf %113, %117 : vector<8x32xf32>
    %119 = vector.extract_strided_slice %109 {offsets = [2, 0], sizes = [8, 64], strides = [1, 1]} : vector<10x64xbf16> to vector<8x64xbf16>
    %c2_65 = arith.constant 2 : index
    %c0_66 = arith.constant 0 : index
    %c0_67 = arith.constant 0 : index
    %120 = vector.load %arg12[%c2_65, %c0_66, %c0_67] : memref<3x64x32xbf16, #tpu.memory_space<vmem>>, vector<1x64x32xbf16>
    %121 = vector.shape_cast %120 : vector<1x64x32xbf16> to vector<64x32xbf16>
    %cst_68 = arith.constant dense<0.000000e+00> : vector<8x32xf32>
    %122 = tpu.matmul %119, %121, %cst_68 {dimension_numbers = #tpu.dot_dimension_numbers<[1], [0], [0], [1], [0, 0, 1, 1], [], []>} : vector<8x64xbf16>, vector<64x32xbf16>, vector<8x32xf32> -> vector<8x32xf32>
    %123 = arith.addf %118, %122 : vector<8x32xf32>
    %c0_69 = arith.constant 0 : index
    %c0_70 = arith.constant 0 : index
    %124 = vector.load %arg13[%c0_69, %c0_70] : memref<1x32xf32, #tpu.memory_space<vmem>>, vector<1x32xf32>
    %125 = vector.broadcast %124 : vector<1x32xf32> to vector<8x32xf32>
    %126 = arith.addf %123, %125 : vector<8x32xf32>
    %cst_71 = arith.constant 0.000000e+00 : f32
    %127 = vector.broadcast %cst_71 : f32 to vector<8x32xf32>
    %128 = arith.maximumf %126, %127 : vector<8x32xf32>
    %129 = vector.shape_cast %128 : vector<8x32xf32> to vector<1x8x32xf32>
    %130 = arith.truncf %129 : vector<1x8x32xf32> to vector<1x8x32xbf16>
    %c0_72 = arith.constant 0 : index
    %c0_73 = arith.constant 0 : index
    %c0_74 = arith.constant 0 : index
    %131 = vector.load %arg14[%c0_72, %c0_73, %c0_74] : memref<1x8x32xbf16, #tpu.memory_space<vmem>>, vector<1x8x32xbf16>
    tpu.vector_store %arg14[%c0_72, %c0_73, %c0_74], %130 {strides = array<i32>} : memref<1x8x32xbf16, #tpu.memory_space<vmem>>, vector<1x8x32xbf16>,
    return
  }
  func.func @transform_0(%arg0: i32, %arg1: i32) -> (i32, i32, i32) {
    %c0_i32 = arith.constant 0 : i32
    %c0_i32_0 = arith.constant 0 : i32
    return %arg0, %arg1, %c0_i32 : i32, i32, i32
  }
  func.func @transform_1(%arg0: i32, %arg1: i32) -> (i32, i32, i32, i32) {
    %c0_i32 = arith.constant 0 : i32
    %c0_i32_0 = arith.constant 0 : i32
    %c0_i32_1 = arith.constant 0 : i32
    return %arg0, %arg1, %c0_i32, %c0_i32_0 : i32, i32, i32, i32
  }
  func.func @transform_2(%arg0: i32, %arg1: i32) -> (i32, i32) {
    %c0_i32 = arith.constant 0 : i32
    %c0_i32_0 = arith.constant 0 : i32
    %c0_i32_1 = arith.constant 0 : i32
    return %c0_i32, %c0_i32_0 : i32, i32
  }
  func.func @transform_3(%arg0: i32, %arg1: i32) -> (i32, i32) {
    %c0_i32 = arith.constant 0 : i32
    %c0_i32_0 = arith.constant 0 : i32
    %c0_i32_1 = arith.constant 0 : i32
    return %c0_i32, %c0_i32_0 : i32, i32
  }
  func.func @transform_4(%arg0: i32, %arg1: i32) -> (i32, i32, i32) {
    %c0_i32 = arith.constant 0 : i32
    %c0_i32_0 = arith.constant 0 : i32
    %c0_i32_1 = arith.constant 0 : i32
    %c0_i32_2 = arith.constant 0 : i32
    return %c0_i32, %c0_i32_0, %c0_i32_1 : i32, i32, i32
  }
  func.func @transform_5(%arg0: i32, %arg1: i32) -> (i32, i32) {
    %c0_i32 = arith.constant 0 : i32
    %c0_i32_0 = arith.constant 0 : i32
    %c0_i32_1 = arith.constant 0 : i32
    return %c0_i32, %c0_i32_0 : i32, i32
  }
  func.func @transform_6(%arg0: i32, %arg1: i32) -> (i32, i32, i32) {
    %c0_i32 = arith.constant 0 : i32
    %c0_i32_0 = arith.constant 0 : i32
    %c0_i32_1 = arith.constant 0 : i32
    %c0_i32_2 = arith.constant 0 : i32
    return %c0_i32, %c0_i32_0, %c0_i32_1 : i32, i32, i32
  }
  func.func @transform_7(%arg0: i32, %arg1: i32) -> (i32, i32) {
    %c0_i32 = arith.constant 0 : i32
    %c0_i32_0 = arith.constant 0 : i32
    %c0_i32_1 = arith.constant 0 : i32
    return %c0_i32, %c0_i32_0 : i32, i32
  }
  func.func @transform_8(%arg0: i32, %arg1: i32) -> (i32, i32) {
    %c0_i32 = arith.constant 0 : i32
    %c0_i32_0 = arith.constant 0 : i32
    %c0_i32_1 = arith.constant 0 : i32
    return %c0_i32, %c0_i32_0 : i32, i32
  }
  func.func @transform_9(%arg0: i32, %arg1: i32) -> (i32, i32) {
    %c0_i32 = arith.constant 0 : i32
    %c0_i32_0 = arith.constant 0 : i32
    %c0_i32_1 = arith.constant 0 : i32
    return %c0_i32, %c0_i32_0 : i32, i32
  }
  func.func @transform_10(%arg0: i32, %arg1: i32) -> (i32, i32, i32) {
    %c0_i32 = arith.constant 0 : i32
    %c0_i32_0 = arith.constant 0 : i32
    %c0_i32_1 = arith.constant 0 : i32
    %c0_i32_2 = arith.constant 0 : i32
    return %c0_i32, %c0_i32_0, %c0_i32_1 : i32, i32, i32
  }
  func.func @transform_11(%arg0: i32, %arg1: i32) -> (i32, i32) {
    %c0_i32 = arith.constant 0 : i32
    %c0_i32_0 = arith.constant 0 : i32
    %c0_i32_1 = arith.constant 0 : i32
    return %c0_i32, %c0_i32_0 : i32, i32
  }
  func.func @transform_12(%arg0: i32, %arg1: i32) -> (i32, i32, i32) {
    %c0_i32 = arith.constant 0 : i32
    %c0_i32_0 = arith.constant 0 : i32
    return %arg0, %arg1, %c0_i32 : i32, i32, i32
  }
}

</mosaic_0001>

<llo_original>
// kernel: encoder_forward.1
$region0: #{encoder_forward.1}
  #allocation0 [shape = 'u32[]', space=smem, size = 0x4, offset = 0x4, fixed_abs, tag = 'smem constant byte address 0x4 - core index']
  #allocation1 [shape = 'u32[144,128]{1,0:T(1,128)}', space=vmem, size = 0x12000, scoped, tag = 'internal scratch']
  %s0 = inlined_call_operand.vmem [shape: bf16[2,16,1102], index: 0, kind: input, shape index: {}]
  %s1 = inlined_call_operand.vmem [shape: bf16[2,2,16,1102], index: 1, kind: input, shape index: {}]
  %s2 = inlined_call_operand.vmem [shape: bf16[1102,192], index: 2, kind: input, shape index: {}]
  %s3 = inlined_call_operand.vmem [shape: f32[1,64], index: 3, kind: input, shape index: {}]
  %s4 = inlined_call_operand.vmem [shape: bf16[3,64,64], index: 4, kind: input, shape index: {}]
  %s5 = inlined_call_operand.vmem [shape: f32[1,64], index: 5, kind: input, shape index: {}]
  %s6 = inlined_call_operand.vmem [shape: bf16[3,64,64], index: 6, kind: input, shape index: {}]
  %s7 = inlined_call_operand.vmem [shape: f32[1,64], index: 7, kind: input, shape index: {}]
  %s8 = inlined_call_operand.vmem [shape: f32[1,64], index: 8, kind: input, shape index: {}]
  %s9 = inlined_call_operand.vmem [shape: f32[1,64], index: 9, kind: input, shape index: {}]
  %s10 = inlined_call_operand.vmem [shape: bf16[3,64,32], index: 10, kind: input, shape index: {}]
  %s11 = inlined_call_operand.vmem [shape: f32[1,32], index: 11, kind: input, shape index: {}]
  %s12 = inlined_call_operand.hbm [shape: bf16[2,16,32], index: 12, kind: output, shape index: {}]
  %s13 = sld [smem:[#allocation0]]
  $region81: #{encoder_forward.1} parent=0
    _
  %s15 = ssub.s32 1, %s13
  %s16 = scalar_select 0, %s15, %s13
  $region1: #{encoder_forward.1} parent=0
    #allocation2 [shape = 'u8[4096]{0}', space=vmem, size = 0x1000, scoped, tag = 'output window, operand 0']
    #allocation3 [shape = 's32[2]{0}', space=sflag, size = 0x8, scoped, tag = 'scoped memory for encoder_forward.1']
    %17 = vsyncpa [#allocation3], 0
    %s18 = scalar_lea.sflag [#allocation3], 1
    %19 = vsyncpa %s18, 0
    loop: start=0, step=1, limit=6
    $region2: #{encoder_forward.1} parent=1 // loop_pre_header
      _
    $region3: #{encoder_forward.1} parent=1 // loop_header
      %s21 = sphi 0, %s25
      %p22 = scmp.ge.s32.totalorder %s21, 6
      %s28 = sphi 0, %s40
      %s29 = sphi 0, %s36
      %s30 = sphi 0, %s28
      %s31 = sphi 0, %s29
      %s32 = sphi 0, %s30
      %s33 = sphi 0, %s31
      %s45 = sphi 0, %s47
      %s48 = sphi 0, %s45
      %s49 = sphi 0, %s48
      %s65 = sphi 0, %s49
      %s73 = sphi 0, %s75
      %s76 = sphi 0, %s73
      %s77 = sphi 0, %s76
      %s93 = sphi 0, %s77
      %s97 = sphi 0, %s97
      %s99 = sphi 0, %s97
      %s100 = sphi 0, %s99
      %s114 = sphi 0, %s100
      %s118 = sphi 0, %s118
      %s120 = sphi 0, %s118
      %s121 = sphi 0, %s120
      %s135 = sphi 0, %s121
      %s139 = sphi 0, %s139
      %s141 = sphi 0, %s139
      %s142 = sphi 0, %s141
      %s156 = sphi 0, %s142
      %s160 = sphi 0, %s160
      %s162 = sphi 0, %s160
      %s163 = sphi 0, %s162
      %s177 = sphi 0, %s163
      %s181 = sphi 0, %s181
      %s183 = sphi 0, %s181
      %s184 = sphi 0, %s183
      %s198 = sphi 0, %s184
      %s202 = sphi 0, %s202
      %s204 = sphi 0, %s202
      %s205 = sphi 0, %s204
      %s219 = sphi 0, %s205
      %s223 = sphi 0, %s223
      %s225 = sphi 0, %s223
      %s226 = sphi 0, %s225
      %s240 = sphi 0, %s226
      %s244 = sphi 0, %s244
      %s246 = sphi 0, %s244
      %s247 = sphi 0, %s246
      %s261 = sphi 0, %s247
      %s265 = sphi 0, %s265
      %s267 = sphi 0, %s265
      %s268 = sphi 0, %s267
      %s282 = sphi 0, %s268
      %s286 = sphi 0, %s286
      %s288 = sphi 0, %s286
      %s289 = sphi 0, %s288
      %s303 = sphi 0, %s289
      %s311 = sphi 0, %s313
      %s314 = sphi 0, %s311
      %s315 = sphi 0, %s314
      %s331 = sphi 0, %s315
    $region4: #{encoder_forward.1} parent=1 // loop_header_branch
      %24 = sbr.rel (%p22) target = $region8
    $region5: #{encoder_forward.1} parent=1 // loop_body
      %s26 = ssub.s32 %s21, 1
      %s27 = ssub.s32 %s21, 2
      %s34 = sadd.s32 1, %s29
      %p35 = scmp.ge.s32.totalorder %s34, 2
      %s36 = scalar_select %p35, 0, %s34
      %s37 = sadd.s32 1, %s28
      %s38 = scalar_select %p35, %s37, %s28
      %p39 = scmp.ge.s32.totalorder %s38, 2
      %s40 = scalar_select %p39, 0, %s38
      %s41 = ssub.s32 %s28, %s40
      %s42 = ssub.s32 %s29, %s36
      %s43 = sor.u32 %s41, %s42
      %p44 = scmp.eq.s32.totalorder %s43, 0
      %s46 = sadd.s32 %s45, 1
      %s47 = scalar_select %p44, %s45, %s46
      %p50 = pneg %p44
      %p51 = scmp.eq.s32.totalorder %s21, 3
      %p52 = por %p50, %p51
      %p53 = scmp.ne.s32.totalorder %s45, %s48
      %p54 = scmp.eq.s32.totalorder %s21, 0
      %p55 = por %p53, %p54
      %p56 = scmp.ne.s32.totalorder %s45, %s48
      %p57 = scmp.eq.s32.totalorder %s26, 3
      %p58 = por %p56, %p57
      %p59 = scmp.ne.s32.totalorder %s48, %s49
      %p60 = scmp.eq.s32.totalorder %s26, 0
      %p61 = por %p59, %p60
      %p62 = scmp.ne.s32.totalorder %s48, %s49
      %p63 = scmp.eq.s32.totalorder %s27, 3
      %p64 = por %p62, %p63
      %p66 = scmp.ne.s32.totalorder %s49, %s65
      %p67 = scmp.eq.s32.totalorder %s27, 0
      %p68 = por %p66, %p67
      %s69 = ssub.s32 %s28, %s40
      %s70 = ssub.s32 %s29, %s36
      %s71 = sor.u32 %s69, %s70
      %p72 = scmp.eq.s32.totalorder %s71, 0
      %s74 = sadd.s32 %s73, 1
      %s75 = scalar_select %p72, %s73, %s74
      %p78 = pneg %p72
      %p79 = scmp.eq.s32.totalorder %s21, 3
      %p80 = por %p78, %p79
      %p81 = scmp.ne.s32.totalorder %s73, %s76
      %p82 = scmp.eq.s32.totalorder %s21, 0
      %p83 = por %p81, %p82
      %p84 = scmp.ne.s32.totalorder %s73, %s76
      %p85 = scmp.eq.s32.totalorder %s26, 3
      %p86 = por %p84, %p85
      %p87 = scmp.ne.s32.totalorder %s76, %s77
      %p88 = scmp.eq.s32.totalorder %s26, 0
      %p89 = por %p87, %p88
      %p90 = scmp.ne.s32.totalorder %s76, %s77
      %p91 = scmp.eq.s32.totalorder %s27, 3
      %p92 = por %p90, %p91
      %p94 = scmp.ne.s32.totalorder %s77, %s93
      %p95 = scmp.eq.s32.totalorder %s27, 0
      %p96 = por %p94, %p95
      %s98 = sadd.s32 %s97, 1
      %p101 = scmp.eq.s32.totalorder %s21, 3
      %p102 = scmp.ne.s32.totalorder %s97, %s99
      %p103 = scmp.eq.s32.totalorder %s21, 0
      %p104 = por %p102, %p103
      %p105 = scmp.ne.s32.totalorder %s97, %s99
      %p106 = scmp.eq.s32.totalorder %s26, 3
      %p107 = por %p105, %p106
      %p108 = scmp.ne.s32.totalorder %s99, %s100
      %p109 = scmp.eq.s32.totalorder %s26, 0
      %p110 = por %p108, %p109
      %p111 = scmp.ne.s32.totalorder %s99, %s100
      %p112 = scmp.eq.s32.totalorder %s27, 3
      %p113 = por %p111, %p112
      %p115 = scmp.ne.s32.totalorder %s100, %s114
      %p116 = scmp.eq.s32.totalorder %s27, 0
      %p117 = por %p115, %p116
      %s119 = sadd.s32 %s118, 1
      %p122 = scmp.eq.s32.totalorder %s21, 3
      %p123 = scmp.ne.s32.totalorder %s118, %s120
      %p124 = scmp.eq.s32.totalorder %s21, 0
      %p125 = por %p123, %p124
      %p126 = scmp.ne.s32.totalorder %s118, %s120
      %p127 = scmp.eq.s32.totalorder %s26, 3
      %p128 = por %p126, %p127
      %p129 = scmp.ne.s32.totalorder %s120, %s121
      %p130 = scmp.eq.s32.totalorder %s26, 0
      %p131 = por %p129, %p130
      %p132 = scmp.ne.s32.totalorder %s120, %s121
      %p133 = scmp.eq.s32.totalorder %s27, 3
      %p134 = por %p132, %p133
      %p136 = scmp.ne.s32.totalorder %s121, %s135
      %p137 = scmp.eq.s32.totalorder %s27, 0
      %p138 = por %p136, %p137
      %s140 = sadd.s32 %s139, 1
      %p143 = scmp.eq.s32.totalorder %s21, 3
      %p144 = scmp.ne.s32.totalorder %s139, %s141
      %p145 = scmp.eq.s32.totalorder %s21, 0
      %p146 = por %p144, %p145
      %p147 = scmp.ne.s32.totalorder %s139, %s141
      %p148 = scmp.eq.s32.totalorder %s26, 3
      %p149 = por %p147, %p148
      %p150 = scmp.ne.s32.totalorder %s141, %s142
      %p151 = scmp.eq.s32.totalorder %s26, 0
      %p152 = por %p150, %p151
      %p153 = scmp.ne.s32.totalorder %s141, %s142
      %p154 = scmp.eq.s32.totalorder %s27, 3
      %p155 = por %p153, %p154
      %p157 = scmp.ne.s32.totalorder %s142, %s156
      %p158 = scmp.eq.s32.totalorder %s27, 0
      %p159 = por %p157, %p158
      %s161 = sadd.s32 %s160, 1
      %p164 = scmp.eq.s32.totalorder %s21, 3
      %p165 = scmp.ne.s32.totalorder %s160, %s162
      %p166 = scmp.eq.s32.totalorder %s21, 0
      %p167 = por %p165, %p166
      %p168 = scmp.ne.s32.totalorder %s160, %s162
      %p169 = scmp.eq.s32.totalorder %s26, 3
      %p170 = por %p168, %p169
      %p171 = scmp.ne.s32.totalorder %s162, %s163
      %p172 = scmp.eq.s32.totalorder %s26, 0
      %p173 = por %p171, %p172
      %p174 = scmp.ne.s32.totalorder %s162, %s163
      %p175 = scmp.eq.s32.totalorder %s27, 3
      %p176 = por %p174, %p175
      %p178 = scmp.ne.s32.totalorder %s163, %s177
      %p179 = scmp.eq.s32.totalorder %s27, 0
      %p180 = por %p178, %p179
      %s182 = sadd.s32 %s181, 1
      %p185 = scmp.eq.s32.totalorder %s21, 3
      %p186 = scmp.ne.s32.totalorder %s181, %s183
      %p187 = scmp.eq.s32.totalorder %s21, 0
      %p188 = por %p186, %p187
      %p189 = scmp.ne.s32.totalorder %s181, %s183
      %p190 = scmp.eq.s32.totalorder %s26, 3
      %p191 = por %p189, %p190
      %p192 = scmp.ne.s32.totalorder %s183, %s184
      %p193 = scmp.eq.s32.totalorder %s26, 0
      %p194 = por %p192, %p193
      %p195 = scmp.ne.s32.totalorder %s183, %s184
      %p196 = scmp.eq.s32.totalorder %s27, 3
      %p197 = por %p195, %p196
      %p199 = scmp.ne.s32.totalorder %s184, %s198
      %p200 = scmp.eq.s32.totalorder %s27, 0
      %p201 = por %p199, %p200
      %s203 = sadd.s32 %s202, 1
      %p206 = scmp.eq.s32.totalorder %s21, 3
      %p207 = scmp.ne.s32.totalorder %s202, %s204
      %p208 = scmp.eq.s32.totalorder %s21, 0
      %p209 = por %p207, %p208
      %p210 = scmp.ne.s32.totalorder %s202, %s204
      %p211 = scmp.eq.s32.totalorder %s26, 3
      %p212 = por %p210, %p211
      %p213 = scmp.ne.s32.totalorder %s204, %s205
      %p214 = scmp.eq.s32.totalorder %s26, 0
      %p215 = por %p213, %p214
      %p216 = scmp.ne.s32.totalorder %s204, %s205
      %p217 = scmp.eq.s32.totalorder %s27, 3
      %p218 = por %p216, %p217
      %p220 = scmp.ne.s32.totalorder %s205, %s219
      %p221 = scmp.eq.s32.totalorder %s27, 0
      %p222 = por %p220, %p221
      %s224 = sadd.s32 %s223, 1
      %p227 = scmp.eq.s32.totalorder %s21, 3
      %p228 = scmp.ne.s32.totalorder %s223, %s225
      %p229 = scmp.eq.s32.totalorder %s21, 0
      %p230 = por %p228, %p229
      %p231 = scmp.ne.s32.totalorder %s223, %s225
      %p232 = scmp.eq.s32.totalorder %s26, 3
      %p233 = por %p231, %p232
      %p234 = scmp.ne.s32.totalorder %s225, %s226
      %p235 = scmp.eq.s32.totalorder %s26, 0
      %p236 = por %p234, %p235
      %p237 = scmp.ne.s32.totalorder %s225, %s226
      %p238 = scmp.eq.s32.totalorder %s27, 3
      %p239 = por %p237, %p238
      %p241 = scmp.ne.s32.totalorder %s226, %s240
      %p242 = scmp.eq.s32.totalorder %s27, 0
      %p243 = por %p241, %p242
      %s245 = sadd.s32 %s244, 1
      %p248 = scmp.eq.s32.totalorder %s21, 3
      %p249 = scmp.ne.s32.totalorder %s244, %s246
      %p250 = scmp.eq.s32.totalorder %s21, 0
      %p251 = por %p249, %p250
      %p252 = scmp.ne.s32.totalorder %s244, %s246
      %p253 = scmp.eq.s32.totalorder %s26, 3
      %p254 = por %p252, %p253
      %p255 = scmp.ne.s32.totalorder %s246, %s247
      %p256 = scmp.eq.s32.totalorder %s26, 0
      %p257 = por %p255, %p256
      %p258 = scmp.ne.s32.totalorder %s246, %s247
      %p259 = scmp.eq.s32.totalorder %s27, 3
      %p260 = por %p258, %p259
      %p262 = scmp.ne.s32.totalorder %s247, %s261
      %p263 = scmp.eq.s32.totalorder %s27, 0
      %p264 = por %p262, %p263
      %s266 = sadd.s32 %s265, 1
      %p269 = scmp.eq.s32.totalorder %s21, 3
      %p270 = scmp.ne.s32.totalorder %s265, %s267
      %p271 = scmp.eq.s32.totalorder %s21, 0
      %p272 = por %p270, %p271
      %p273 = scmp.ne.s32.totalorder %s265, %s267
      %p274 = scmp.eq.s32.totalorder %s26, 3
      %p275 = por %p273, %p274
      %p276 = scmp.ne.s32.totalorder %s267, %s268
      %p277 = scmp.eq.s32.totalorder %s26, 0
      %p278 = por %p276, %p277
      %p279 = scmp.ne.s32.totalorder %s267, %s268
      %p280 = scmp.eq.s32.totalorder %s27, 3
      %p281 = por %p279, %p280
      %p283 = scmp.ne.s32.totalorder %s268, %s282
      %p284 = scmp.eq.s32.totalorder %s27, 0
      %p285 = por %p283, %p284
      %s287 = sadd.s32 %s286, 1
      %p290 = scmp.eq.s32.totalorder %s21, 3
      %p291 = scmp.ne.s32.totalorder %s286, %s288
      %p292 = scmp.eq.s32.totalorder %s21, 0
      %p293 = por %p291, %p292
      %p294 = scmp.ne.s32.totalorder %s286, %s288
      %p295 = scmp.eq.s32.totalorder %s26, 3
      %p296 = por %p294, %p295
      %p297 = scmp.ne.s32.totalorder %s288, %s289
      %p298 = scmp.eq.s32.totalorder %s26, 0
      %p299 = por %p297, %p298
      %p300 = scmp.ne.s32.totalorder %s288, %s289
      %p301 = scmp.eq.s32.totalorder %s27, 3
      %p302 = por %p300, %p301
      %p304 = scmp.ne.s32.totalorder %s289, %s303
      %p305 = scmp.eq.s32.totalorder %s27, 0
      %p306 = por %p304, %p305
      %s307 = ssub.s32 %s28, %s40
      %s308 = ssub.s32 %s29, %s36
      %s309 = sor.u32 %s307, %s308
      %p310 = scmp.eq.s32.totalorder %s309, 0
      %s312 = sadd.s32 %s311, 1
      %s313 = scalar_select %p310, %s311, %s312
      %p316 = pneg %p310
      %p317 = scmp.eq.s32.totalorder %s21, 3
      %p318 = por %p316, %p317
      %p319 = scmp.ne.s32.totalorder %s311, %s314
      %p320 = scmp.eq.s32.totalorder %s21, 0
      %p321 = por %p319, %p320
      %p322 = scmp.ne.s32.totalorder %s311, %s314
      %p323 = scmp.eq.s32.totalorder %s26, 3
      %p324 = por %p322, %p323
      %p325 = scmp.ne.s32.totalorder %s314, %s315
      %p326 = scmp.eq.s32.totalorder %s26, 0
      %p327 = por %p325, %p326
      %p328 = scmp.ne.s32.totalorder %s314, %s315
      %p329 = scmp.eq.s32.totalorder %s27, 3
      %p330 = por %p328, %p329
      %p332 = scmp.ne.s32.totalorder %s315, %s331
      %p333 = scmp.eq.s32.totalorder %s27, 0
      %p334 = por %p332, %p333
      %p335 = scmp.le.s32.totalorder 1, %s21
      %p336 = scmp.lt.s32.totalorder %s21, 5
      %p337 = pnand %p335, %p336
      %p338 = pneg %p337
      // Predicated region
      $region9: #{encoder_forward.1} parent=5 // pred_check
        _
      $region10: #{encoder_forward.1} parent=5 // pred_check_branch
        %340 = sbr.rel (%p337) target = $region12
      $region11: #{encoder_forward.1} parent=5 // pred_region
        %s341 = ssub.s32 %s21, 1
        // Predicated region
        $region13: #{encoder_forward.1} parent=11 // pred_check
          %p342 = pneg %p110
        $region14: #{encoder_forward.1} parent=11 // pred_check_branch
          %344 = sbr.rel (%p342) target = $region16
        $region15: #{encoder_forward.1} parent=11 // pred_region
          _
        $region16: #{encoder_forward.1} parent=11 // pred_fallthru
          _
        // Predicated region
        $region17: #{encoder_forward.1} parent=11 // pred_check
          %p345 = pneg %p131
        $region18: #{encoder_forward.1} parent=11 // pred_check_branch
          %347 = sbr.rel (%p345) target = $region20
        $region19: #{encoder_forward.1} parent=11 // pred_region
          _
        $region20: #{encoder_forward.1} parent=11 // pred_fallthru
          _
        // Predicated region
        $region21: #{encoder_forward.1} parent=11 // pred_check
          %p348 = pneg %p152
        $region22: #{encoder_forward.1} parent=11 // pred_check_branch
          %350 = sbr.rel (%p348) target = $region24
        $region23: #{encoder_forward.1} parent=11 // pred_region
          _
        $region24: #{encoder_forward.1} parent=11 // pred_fallthru
          _
        // Predicated region
        $region25: #{encoder_forward.1} parent=11 // pred_check
          %p351 = pneg %p173
        $region26: #{encoder_forward.1} parent=11 // pred_check_branch
          %353 = sbr.rel (%p351) target = $region28
        $region27: #{encoder_forward.1} parent=11 // pred_region
          _
        $region28: #{encoder_forward.1} parent=11 // pred_fallthru
          _
        // Predicated region
        $region29: #{encoder_forward.1} parent=11 // pred_check
          %p354 = pneg %p194
        $region30: #{encoder_forward.1} parent=11 // pred_check_branch
          %356 = sbr.rel (%p354) target = $region32
        $region31: #{encoder_forward.1} parent=11 // pred_region
          _
        $region32: #{encoder_forward.1} parent=11 // pred_fallthru
          _
        // Predicated region
        $region33: #{encoder_forward.1} parent=11 // pred_check
          %p357 = pneg %p215
        $region34: #{encoder_forward.1} parent=11 // pred_check_branch
          %359 = sbr.rel (%p357) target = $region36
        $region35: #{encoder_forward.1} parent=11 // pred_region
          _
        $region36: #{encoder_forward.1} parent=11 // pred_fallthru
          _
        // Predicated region
        $region37: #{encoder_forward.1} parent=11 // pred_check
          %p360 = pneg %p236
        $region38: #{encoder_forward.1} parent=11 // pred_check_branch
          %362 = sbr.rel (%p360) target = $region40
        $region39: #{encoder_forward.1} parent=11 // pred_region
          _
        $region40: #{encoder_forward.1} parent=11 // pred_fallthru
          _
        // Predicated region
        $region41: #{encoder_forward.1} parent=11 // pred_check
          %p363 = pneg %p257
        $region42: #{encoder_forward.1} parent=11 // pred_check_branch
          %365 = sbr.rel (%p363) target = $region44
        $region43: #{encoder_forward.1} parent=11 // pred_region
          _
        $region44: #{encoder_forward.1} parent=11 // pred_fallthru
          _
        // Predicated region
        $region45: #{encoder_forward.1} parent=11 // pred_check
          %p366 = pneg %p278
        $region46: #{encoder_forward.1} parent=11 // pred_check_branch
          %368 = sbr.rel (%p366) target = $region48
        $region47: #{encoder_forward.1} parent=11 // pred_region
          _
        $region48: #{encoder_forward.1} parent=11 // pred_fallthru
          _
        // Predicated region
        $region49: #{encoder_forward.1} parent=11 // pred_check
          %p369 = pneg %p299
        $region50: #{encoder_forward.1} parent=11 // pred_check_branch
          %371 = sbr.rel (%p369) target = $region52
        $region51: #{encoder_forward.1} parent=11 // pred_region
          _
        $region52: #{encoder_forward.1} parent=11 // pred_fallthru
          _
      $region12: #{encoder_forward.1} parent=5 // pred_fallthru
        _
      %p372 = scmp.lt.s32.totalorder %s21, 4
      // Predicated region
      $region53: #{encoder_forward.1} parent=5 // pred_check
        %p373 = pneg %p372
      $region54: #{encoder_forward.1} parent=5 // pred_check_branch
        %375 = sbr.rel (%p373) target = $region56
      $region55: #{encoder_forward.1} parent=5 // pred_region
        // Predicated region
        $region57: #{encoder_forward.1} parent=55 // pred_check
          %p376 = pneg %p55
        $region58: #{encoder_forward.1} parent=55 // pred_check_branch
          %378 = sbr.rel (%p376) target = $region60
        $region59: #{encoder_forward.1} parent=55 // pred_region
          %p379 = scmp.lt.s32.totalorder %s28, 1
          %s380 = scalar_select %p379, %s28, 1
          %p381 = scmp.lt.s32.totalorder %s29, 1
          %s382 = scalar_select %p381, %s29, 1
          %s383 = smul.addr %s382, 9
          %s384 = smul.addr %s380, 18
          %s385 = sadd.s32 %s383, %s384
          %s386 = smul.addr %s385, 4
          %s387 = scalar_lea.vmem %s0, %s386
        $region60: #{encoder_forward.1} parent=55 // pred_fallthru
          _
        // Predicated region
        $region61: #{encoder_forward.1} parent=55 // pred_check
          %p388 = pneg %p83
        $region62: #{encoder_forward.1} parent=55 // pred_check_branch
          %390 = sbr.rel (%p388) target = $region64
        $region63: #{encoder_forward.1} parent=55 // pred_region
          %p391 = scmp.lt.s32.totalorder %s28, 1
          %s392 = scalar_select %p391, %s28, 1
          %p393 = scmp.lt.s32.totalorder %s29, 1
          %s394 = scalar_select %p393, %s29, 1
          %s395 = smul.addr %s394, 18
          %s396 = smul.addr %s392, 36
          %s397 = sadd.s32 %s395, %s396
          %s398 = smul.addr %s397, 4
          %s399 = scalar_lea.vmem %s1, %s398
        $region64: #{encoder_forward.1} parent=55 // pred_fallthru
          _
      $region56: #{encoder_forward.1} parent=5 // pred_fallthru
        _
      %p400 = scmp.le.s32.totalorder 1, %s21
      %p401 = scmp.lt.s32.totalorder %s21, 5
      %p402 = pnand %p400, %p401
      %p403 = pneg %p402
      // Predicated region
      $region65: #{encoder_forward.1} parent=5 // pred_check
        _
      $region66: #{encoder_forward.1} parent=5 // pred_check_branch
        %405 = sbr.rel (%p402) target = $region68
      $region67: #{encoder_forward.1} parent=5 // pred_region
        %s406 = ssub.s32 %s21, 1
        %p407 = scmp.lt.s32.totalorder %s30, 1
        %s408 = scalar_select %p407, %s30, 1
        %p409 = scmp.lt.s32.totalorder %s31, 1
        %s410 = scalar_select %p409, %s31, 1
        %s411 = smul.addr %s410, 9
        %s412 = smul.addr %s408, 18
        %s413 = sadd.s32 %s411, %s412
        %s414 = smul.addr %s413, 4
        %s415 = scalar_lea.vmem %s0, %s414
        %p416 = pneg %p61
        %p417 = pneg %p58
        %p418 = scmp.lt.s32.totalorder %s30, 1
        %s419 = scalar_select %p418, %s30, 1
        %p420 = scmp.lt.s32.totalorder %s31, 1
        %s421 = scalar_select %p420, %s31, 1
        %s422 = smul.addr %s421, 18
        %s423 = smul.addr %s419, 36
        %s424 = sadd.s32 %s422, %s423
        %s425 = smul.addr %s424, 4
        %s426 = scalar_lea.vmem %s1, %s425
        %p427 = pneg %p89
        %p428 = pneg %p86
        %p429 = pneg %p110
        %p430 = pneg %p107
        %p431 = pneg %p131
        %p432 = pneg %p128
        %p433 = pneg %p152
        %p434 = pneg %p149
        %p435 = pneg %p173
        %p436 = pneg %p170
        %p437 = pneg %p194
        %p438 = pneg %p191
        %p439 = pneg %p215
        %p440 = pneg %p212
        %p441 = pneg %p236
        %p442 = pneg %p233
        %p443 = pneg %p257
        %p444 = pneg %p254
        %p445 = pneg %p278
        %p446 = pneg %p275
        %p447 = pneg %p299
        %p448 = pneg %p296
        %p449 = pneg %p327
        %p450 = pneg %p324
        %s451 = sand.u32 %s314, 1
        %s452 = scalar_lea.sflag [#allocation3], %s451
        %s453 = sand.u32 %s314, 1
        %s454 = smul.addr %s453, 4
        %s455 = scalar_lea.vmem [#allocation2], %s454
        %p456 = scmp.lt.s32.totalorder %s30, 1
        %s457 = scalar_select %p456, %s30, 1
        %p458 = scmp.lt.s32.totalorder %s31, 1
        %s459 = scalar_select %p458, %s31, 1
        %s460 = smul.addr %s459, 9
        %s461 = smul.addr %s457, 18
        %s462 = sadd.s32 %s460, %s461
        %s463 = smul.addr %s462, 4
        %s464 = scalar_lea.vmem %s0, %s463
        %p465 = scmp.lt.s32.totalorder %s30, 1
        %s466 = scalar_select %p465, %s30, 1
        %p467 = scmp.lt.s32.totalorder %s31, 1
        %s468 = scalar_select %p467, %s31, 1
        %s469 = smul.addr %s468, 18
        %s470 = smul.addr %s466, 36
        %s471 = sadd.s32 %s469, %s470
        %s472 = smul.addr %s471, 4
        %s473 = scalar_lea.vmem %s1, %s472
        %s475 = smul.u32 %s31, 8
        %v476 = vld [vmem:[%s464] sm:$0xff]
        %v477 = vld [vmem:[%s464 + $0x8] sm:$0xff]
        %v478 = vld [vmem:[%s464 + $0x10] sm:$0xff]
        %v479 = vld [vmem:[%s464 + $0x18] sm:$0xff]
        %v480 = vld [vmem:[%s464 + $0x20] sm:$0xf]
        %v481 = vld [vmem:[%s473] sm:$0xff]
        %v482 = vld [vmem:[%s473 + $0x8] sm:$0xff]
        %v483 = vld [vmem:[%s473 + $0x10] sm:$0xff]
        %v484 = vld [vmem:[%s473 + $0x18] sm:$0xff]
        %v485 = vld [vmem:[%s473 + $0x20] sm:$0xf]
        %v486 = vld [vmem:[%s473 + $0x24] sm:$0xff]
        %v487 = vld [vmem:[%s473 + $0x2c] sm:$0xff]
        %v488 = vld [vmem:[%s473 + $0x34] sm:$0xff]
        %v489 = vld [vmem:[%s473 + $0x3c] sm:$0xff]
        %v490 = vld [vmem:[%s473 + $0x44] sm:$0xf]
        %s491 = ssub.s32 %s475, 8
        %v492 = vlaneseq
        %v493 = vshrl.u32 %v492, 7
        %v494 = vadd.s32 %v493, 8
        %v495 = vadd.s32 %v493, 16
        %v496 = vstv %s491
        %v497 = vadd.s32 %v496, %v493
        %v498 = vadd.s32 %v496, %v494
        %v499 = vadd.s32 %v496, %v495
        %v505 = vunpack.c.l.b16 %v481
        %v506 = vunpack.c.h.b16 %v481
        %v507 = vunpack.c.l.b16 %v482
        %v508 = vunpack.c.h.b16 %v482
        %v509 = vunpack.c.l.b16 %v483
        %v510 = vunpack.c.h.b16 %v483
        %v511 = vunpack.c.l.b16 %v484
        %v512 = vunpack.c.h.b16 %v484
        %v513 = vunpack.c.l.b16 %v485
        %v514 = vpack.c.b16 %v505, %v505
        %v515 = vpack.c.b16 %v506, %v506
        %v516 = vpack.c.b16 %v507, %v507
        %v517 = vpack.c.b16 %v508, %v508
        %v518 = vpack.c.b16 %v509, %v509
        %v519 = vpack.c.b16 %v510, %v510
        %v520 = vpack.c.b16 %v511, %v511
        %v521 = vpack.c.b16 %v512, %v512
        %v522 = vpack.c.b16 %v513, %v513
        %v528 = vunpack.c.l.b16 %v476
        %v529 = vunpack.c.h.b16 %v476
        %v530 = vunpack.c.l.b16 %v477
        %v531 = vunpack.c.h.b16 %v477
        %v532 = vunpack.c.l.b16 %v478
        %v533 = vunpack.c.h.b16 %v478
        %v534 = vunpack.c.l.b16 %v479
        %v535 = vunpack.c.h.b16 %v479
        %v536 = vunpack.c.l.b16 %v480
        %v537 = vpack.c.b16 %v528, %v528
        %v538 = vpack.c.b16 %v529, %v529
        %v539 = vpack.c.b16 %v530, %v530
        %v540 = vpack.c.b16 %v531, %v531
        %v541 = vpack.c.b16 %v532, %v532
        %v542 = vpack.c.b16 %v533, %v533
        %v543 = vpack.c.b16 %v534, %v534
        %v544 = vpack.c.b16 %v535, %v535
        %v545 = vpack.c.b16 %v536, %v536
        %v551 = vunpack.c.l.b16 %v486
        %v552 = vunpack.c.h.b16 %v486
        %v553 = vunpack.c.l.b16 %v487
        %v554 = vunpack.c.h.b16 %v487
        %v555 = vunpack.c.l.b16 %v488
        %v556 = vunpack.c.h.b16 %v488
        %v557 = vunpack.c.l.b16 %v489
        %v558 = vunpack.c.h.b16 %v489
        %v559 = vunpack.c.l.b16 %v490
        %v560 = vpack.c.b16 %v551, %v551
        %v561 = vpack.c.b16 %v552, %v552
        %v562 = vpack.c.b16 %v553, %v553
        %v563 = vpack.c.b16 %v554, %v554
        %v564 = vpack.c.b16 %v555, %v555
        %v565 = vpack.c.b16 %v556, %v556
        %v566 = vpack.c.b16 %v557, %v557
        %v567 = vpack.c.b16 %v558, %v558
        %v568 = vpack.c.b16 %v559, %v559
        %vm577 = vcmask 1043456
        %v580 = vsel %vm577, %v514, %v537
        %v584 = vsel %vm577, %v515, %v538
        %v588 = vsel %vm577, %v516, %v539
        %v592 = vsel %vm577, %v517, %v540
        %v596 = vsel %vm577, %v518, %v541
        %v600 = vsel %vm577, %v519, %v542
        %v604 = vsel %vm577, %v520, %v543
        %v608 = vsel %vm577, %v521, %v544
        %v612 = vsel %vm577, %v522, %v545
        %v613 = vld [vmem:[%s2] sm:$0xff]
        %v614 = vld [vmem:[%s2 + $0x8] sm:$0xff]
        %v615 = vld [vmem:[%s2 + $0x10] sm:$0xff]
        %v616 = vld [vmem:[%s2 + $0x18] sm:$0xff]
        %v617 = vld [vmem:[%s2 + $0x20] sm:$0xff]
        %v618 = vld [vmem:[%s2 + $0x28] sm:$0xff]
        %v619 = vld [vmem:[%s2 + $0x30] sm:$0xff]
        %v620 = vld [vmem:[%s2 + $0x38] sm:$0xff]
        %v621 = vld [vmem:[%s2 + $0x40] sm:$0xff]
        %v622 = vld [vmem:[%s2 + $0x48] sm:$0xff]
        %v623 = vld [vmem:[%s2 + $0x50] sm:$0xff]
        %v624 = vld [vmem:[%s2 + $0x58] sm:$0xff]
        %v625 = vld [vmem:[%s2 + $0x60] sm:$0xff]
        %v626 = vld [vmem:[%s2 + $0x68] sm:$0xff]
        %v627 = vld [vmem:[%s2 + $0x70] sm:$0xff]
        %v628 = vld [vmem:[%s2 + $0x78] sm:$0xff]
        %v629 = vld [vmem:[%s2 + $0x80] sm:$0xff]
        %v630 = vld [vmem:[%s2 + $0x88] sm:$0xff]
        %v631 = vld [vmem:[%s2 + $0x90] sm:$0xff]
        %v632 = vld [vmem:[%s2 + $0x98] sm:$0xff]
        %v633 = vld [vmem:[%s2 + $0xa0] sm:$0xff]
        %v634 = vld [vmem:[%s2 + $0xa8] sm:$0xff]
        %v635 = vld [vmem:[%s2 + $0xb0] sm:$0xff]
        %v636 = vld [vmem:[%s2 + $0xb8] sm:$0xff]
        %v637 = vld [vmem:[%s2 + $0xc0] sm:$0xff]
        %v638 = vld [vmem:[%s2 + $0xc8] sm:$0xff]
        %v639 = vld [vmem:[%s2 + $0xd0] sm:$0xff]
        %v640 = vld [vmem:[%s2 + $0xd8] sm:$0xff]
        %v641 = vld [vmem:[%s2 + $0xe0] sm:$0xff]
        %v642 = vld [vmem:[%s2 + $0xe8] sm:$0xff]
        %v643 = vld [vmem:[%s2 + $0xf0] sm:$0xff]
        %v644 = vld [vmem:[%s2 + $0xf8] sm:$0xff]
        %v645 = vld [vmem:[%s2 + $0x100] sm:$0xff]
        %v646 = vld [vmem:[%s2 + $0x108] sm:$0xff]
        %v647 = vld [vmem:[%s2 + $0x110] sm:$0xff]
        %v648 = vld [vmem:[%s2 + $0x118] sm:$0xff]
        %v649 = vld [vmem:[%s2 + $0x120] sm:$0xff]
        %v650 = vld [vmem:[%s2 + $0x128] sm:$0xff]
        %v651 = vld [vmem:[%s2 + $0x130] sm:$0xff]
        %v652 = vld [vmem:[%s2 + $0x138] sm:$0xff]
        %v653 = vld [vmem:[%s2 + $0x140] sm:$0xff]
        %v654 = vld [vmem:[%s2 + $0x148] sm:$0xff]
        %v655 = vld [vmem:[%s2 + $0x150] sm:$0xff]
        %v656 = vld [vmem:[%s2 + $0x158] sm:$0xff]
        %v657 = vld [vmem:[%s2 + $0x160] sm:$0xff]
        %v658 = vld [vmem:[%s2 + $0x168] sm:$0xff]
        %v659 = vld [vmem:[%s2 + $0x170] sm:$0xff]
        %v660 = vld [vmem:[%s2 + $0x178] sm:$0xff]
        %v661 = vld [vmem:[%s2 + $0x180] sm:$0xff]
        %v662 = vld [vmem:[%s2 + $0x188] sm:$0xff]
        %v663 = vld [vmem:[%s2 + $0x190] sm:$0xff]
        %v664 = vld [vmem:[%s2 + $0x198] sm:$0xff]
        %v665 = vld [vmem:[%s2 + $0x1a0] sm:$0xff]
        %v666 = vld [vmem:[%s2 + $0x1a8] sm:$0xff]
        %v667 = vld [vmem:[%s2 + $0x1b0] sm:$0xff]
        %v668 = vld [vmem:[%s2 + $0x1b8] sm:$0xff]
        %v669 = vld [vmem:[%s2 + $0x1c0] sm:$0xff]
        %v670 = vld [vmem:[%s2 + $0x1c8] sm:$0xff]
        %v671 = vld [vmem:[%s2 + $0x1d0] sm:$0xff]
        %v672 = vld [vmem:[%s2 + $0x1d8] sm:$0xff]
        %v673 = vld [vmem:[%s2 + $0x1e0] sm:$0xff]
        %v674 = vld [vmem:[%s2 + $0x1e8] sm:$0xff]
        %v675 = vld [vmem:[%s2 + $0x1f0] sm:$0xff]
        %v676 = vld [vmem:[%s2 + $0x1f8] sm:$0xff]
        %v677 = vld [vmem:[%s2 + $0x200] sm:$0xff]
        %v678 = vld [vmem:[%s2 + $0x208] sm:$0xff]
        %v679 = vld [vmem:[%s2 + $0x210] sm:$0xff]
        %v680 = vld [vmem:[%s2 + $0x218] sm:$0xff]
        %v681 = vld [vmem:[%s2 + $0x220] sm:$0xff]
        %v682 = vld [vmem:[%s2 + $0x228] sm:$0xff]
        %v683 = vld [vmem:[%s2 + $0x230] sm:$0xff]
        %v684 = vld [vmem:[%s2 + $0x238] sm:$0xff]
        %v685 = vld [vmem:[%s2 + $0x240] sm:$0xff]
        %v686 = vld [vmem:[%s2 + $0x248] sm:$0xff]
        %v687 = vld [vmem:[%s2 + $0x250] sm:$0xff]
        %v688 = vld [vmem:[%s2 + $0x258] sm:$0xff]
        %v689 = vld [vmem:[%s2 + $0x260] sm:$0xff]
        %v690 = vld [vmem:[%s2 + $0x268] sm:$0xff]
        %v691 = vld [vmem:[%s2 + $0x270] sm:$0xff]
        %v692 = vld [vmem:[%s2 + $0x278] sm:$0xff]
        %v693 = vld [vmem:[%s2 + $0x280] sm:$0xff]
        %v694 = vld [vmem:[%s2 + $0x288] sm:$0xff]
        %v695 = vld [vmem:[%s2 + $0x290] sm:$0xff]
        %v696 = vld [vmem:[%s2 + $0x298] sm:$0xff]
        %v697 = vld [vmem:[%s2 + $0x2a0] sm:$0xff]
        %v698 = vld [vmem:[%s2 + $0x2a8] sm:$0xff]
        %v699 = vld [vmem:[%s2 + $0x2b0] sm:$0xff]
        %v700 = vld [vmem:[%s2 + $0x2b8] sm:$0xff]
        %v701 = vld [vmem:[%s2 + $0x2c0] sm:$0xff]
        %v702 = vld [vmem:[%s2 + $0x2c8] sm:$0xff]
        %v703 = vld [vmem:[%s2 + $0x2d0] sm:$0xff]
        %v704 = vld [vmem:[%s2 + $0x2d8] sm:$0xff]
        %v705 = vld [vmem:[%s2 + $0x2e0] sm:$0xff]
        %v706 = vld [vmem:[%s2 + $0x2e8] sm:$0xff]
        %v707 = vld [vmem:[%s2 + $0x2f0] sm:$0xff]
        %v708 = vld [vmem:[%s2 + $0x2f8] sm:$0xff]
        %v709 = vld [vmem:[%s2 + $0x300] sm:$0xff]
        %v710 = vld [vmem:[%s2 + $0x308] sm:$0xff]
        %v711 = vld [vmem:[%s2 + $0x310] sm:$0xff]
        %v712 = vld [vmem:[%s2 + $0x318] sm:$0xff]
        %v713 = vld [vmem:[%s2 + $0x320] sm:$0xff]
        %v714 = vld [vmem:[%s2 + $0x328] sm:$0xff]
        %v715 = vld [vmem:[%s2 + $0x330] sm:$0xff]
        %v716 = vld [vmem:[%s2 + $0x338] sm:$0xff]
        %v717 = vld [vmem:[%s2 + $0x340] sm:$0xff]
        %v718 = vld [vmem:[%s2 + $0x348] sm:$0xff]
        %v719 = vld [vmem:[%s2 + $0x350] sm:$0xff]
        %v720 = vld [vmem:[%s2 + $0x358] sm:$0xff]
        %v721 = vld [vmem:[%s2 + $0x360] sm:$0xff]
        %v722 = vld [vmem:[%s2 + $0x368] sm:$0xff]
        %v723 = vld [vmem:[%s2 + $0x370] sm:$0xff]
        %v724 = vld [vmem:[%s2 + $0x378] sm:$0xff]
        %v725 = vld [vmem:[%s2 + $0x380] sm:$0xff]
        %v726 = vld [vmem:[%s2 + $0x388] sm:$0xff]
        %v727 = vld [vmem:[%s2 + $0x390] sm:$0xff]
        %v728 = vld [vmem:[%s2 + $0x398] sm:$0xff]
        %v729 = vld [vmem:[%s2 + $0x3a0] sm:$0xff]
        %v730 = vld [vmem:[%s2 + $0x3a8] sm:$0xff]
        %v731 = vld [vmem:[%s2 + $0x3b0] sm:$0xff]
        %v732 = vld [vmem:[%s2 + $0x3b8] sm:$0xff]
        %v733 = vld [vmem:[%s2 + $0x3c0] sm:$0xff]
        %v734 = vld [vmem:[%s2 + $0x3c8] sm:$0xff]
        %v735 = vld [vmem:[%s2 + $0x3d0] sm:$0xff]
        %v736 = vld [vmem:[%s2 + $0x3d8] sm:$0xff]
        %v737 = vld [vmem:[%s2 + $0x3e0] sm:$0xff]
        %v738 = vld [vmem:[%s2 + $0x3e8] sm:$0xff]
        %v739 = vld [vmem:[%s2 + $0x3f0] sm:$0xff]
        %v740 = vld [vmem:[%s2 + $0x3f8] sm:$0xff]
        %v741 = vld [vmem:[%s2 + $0x400] sm:$0xff]
        %v742 = vld [vmem:[%s2 + $0x408] sm:$0xff]
        %v743 = vld [vmem:[%s2 + $0x410] sm:$0xff]
        %v744 = vld [vmem:[%s2 + $0x418] sm:$0xff]
        %v745 = vld [vmem:[%s2 + $0x420] sm:$0xff]
        %v746 = vld [vmem:[%s2 + $0x428] sm:$0xff]
        %v747 = vld [vmem:[%s2 + $0x430] sm:$0xff]
        %v748 = vld [vmem:[%s2 + $0x438] sm:$0xff]
        %v749 = vld [vmem:[%s2 + $0x440] sm:$0xff]
        %v750 = vld [vmem:[%s2 + $0x448] sm:$0x77]
        %v889 = vunpack.c.l.b16 %v613
        %v890 = vunpack.c.h.b16 %v613
        %v891 = vunpack.c.l.b16 %v614
        %v892 = vunpack.c.h.b16 %v614
        %v893 = vunpack.c.l.b16 %v615
        %v894 = vunpack.c.h.b16 %v615
        %v895 = vunpack.c.l.b16 %v616
        %v896 = vunpack.c.h.b16 %v616
        %v897 = vunpack.c.l.b16 %v617
        %v898 = vunpack.c.h.b16 %v617
        %v899 = vunpack.c.l.b16 %v618
        %v900 = vunpack.c.h.b16 %v618
        %v901 = vunpack.c.l.b16 %v619
        %v902 = vunpack.c.h.b16 %v619
        %v903 = vunpack.c.l.b16 %v620
        %v904 = vunpack.c.h.b16 %v620
        %v905 = vunpack.c.l.b16 %v621
        %v906 = vunpack.c.h.b16 %v621
        %v907 = vunpack.c.l.b16 %v622
        %v908 = vunpack.c.h.b16 %v622
        %v909 = vunpack.c.l.b16 %v623
        %v910 = vunpack.c.h.b16 %v623
        %v911 = vunpack.c.l.b16 %v624
        %v912 = vunpack.c.h.b16 %v624
        %v913 = vunpack.c.l.b16 %v625
        %v914 = vunpack.c.h.b16 %v625
        %v915 = vunpack.c.l.b16 %v626
        %v916 = vunpack.c.h.b16 %v626
        %v917 = vunpack.c.l.b16 %v627
        %v918 = vunpack.c.h.b16 %v627
        %v919 = vunpack.c.l.b16 %v628
        %v920 = vunpack.c.h.b16 %v628
        %v921 = vunpack.c.l.b16 %v629
        %v922 = vunpack.c.h.b16 %v629
        %v923 = vunpack.c.l.b16 %v630
        %v924 = vunpack.c.h.b16 %v630
        %v925 = vunpack.c.l.b16 %v631
        %v926 = vunpack.c.h.b16 %v631
        %v927 = vunpack.c.l.b16 %v632
        %v928 = vunpack.c.h.b16 %v632
        %v929 = vunpack.c.l.b16 %v633
        %v930 = vunpack.c.h.b16 %v633
        %v931 = vunpack.c.l.b16 %v634
        %v932 = vunpack.c.h.b16 %v634
        %v933 = vunpack.c.l.b16 %v635
        %v934 = vunpack.c.h.b16 %v635
        %v935 = vunpack.c.l.b16 %v636
        %v936 = vunpack.c.h.b16 %v636
        %v937 = vunpack.c.l.b16 %v637
        %v938 = vunpack.c.h.b16 %v637
        %v939 = vunpack.c.l.b16 %v638
        %v940 = vunpack.c.h.b16 %v638
        %v941 = vunpack.c.l.b16 %v639
        %v942 = vunpack.c.h.b16 %v639
        %v943 = vunpack.c.l.b16 %v640
        %v944 = vunpack.c.h.b16 %v640
        %v945 = vunpack.c.l.b16 %v641
        %v946 = vunpack.c.h.b16 %v641
        %v947 = vunpack.c.l.b16 %v642
        %v948 = vunpack.c.h.b16 %v642
        %v949 = vunpack.c.l.b16 %v643
        %v950 = vunpack.c.h.b16 %v643
        %v951 = vunpack.c.l.b16 %v644
        %v952 = vunpack.c.h.b16 %v644
        %v953 = vunpack.c.l.b16 %v645
        %v954 = vunpack.c.h.b16 %v645
        %v955 = vunpack.c.l.b16 %v646
        %v956 = vunpack.c.h.b16 %v646
        %v957 = vunpack.c.l.b16 %v647
        %v958 = vunpack.c.h.b16 %v647
        %v959 = vunpack.c.l.b16 %v648
        %v960 = vunpack.c.h.b16 %v648
        %v961 = vunpack.c.l.b16 %v649
        %v962 = vunpack.c.h.b16 %v649
        %v963 = vunpack.c.l.b16 %v650
        %v964 = vunpack.c.h.b16 %v650
        %v965 = vunpack.c.l.b16 %v651
        %v966 = vunpack.c.h.b16 %v651
        %v967 = vunpack.c.l.b16 %v652
        %v968 = vunpack.c.h.b16 %v652
        %v969 = vunpack.c.l.b16 %v653
        %v970 = vunpack.c.h.b16 %v653
        %v971 = vunpack.c.l.b16 %v654
        %v972 = vunpack.c.h.b16 %v654
        %v973 = vunpack.c.l.b16 %v655
        %v974 = vunpack.c.h.b16 %v655
        %v975 = vunpack.c.l.b16 %v656
        %v976 = vunpack.c.h.b16 %v656
        %v977 = vunpack.c.l.b16 %v657
        %v978 = vunpack.c.h.b16 %v657
        %v979 = vunpack.c.l.b16 %v658
        %v980 = vunpack.c.h.b16 %v658
        %v981 = vunpack.c.l.b16 %v659
        %v982 = vunpack.c.h.b16 %v659
        %v983 = vunpack.c.l.b16 %v660
        %v984 = vunpack.c.h.b16 %v660
        %v985 = vunpack.c.l.b16 %v661
        %v986 = vunpack.c.h.b16 %v661
        %v987 = vunpack.c.l.b16 %v662
        %v988 = vunpack.c.h.b16 %v662
        %v989 = vunpack.c.l.b16 %v663
        %v990 = vunpack.c.h.b16 %v663
        %v991 = vunpack.c.l.b16 %v664
        %v992 = vunpack.c.h.b16 %v664
        %v993 = vunpack.c.l.b16 %v665
        %v994 = vunpack.c.h.b16 %v665
        %v995 = vunpack.c.l.b16 %v666
        %v996 = vunpack.c.h.b16 %v666
        %v997 = vunpack.c.l.b16 %v667
        %v998 = vunpack.c.h.b16 %v667
        %v999 = vunpack.c.l.b16 %v668
        %v1000 = vunpack.c.h.b16 %v668
        %v1001 = vunpack.c.l.b16 %v669
        %v1002 = vunpack.c.h.b16 %v669
        %v1003 = vunpack.c.l.b16 %v670
        %v1004 = vunpack.c.h.b16 %v670
        %v1005 = vunpack.c.l.b16 %v671
        %v1006 = vunpack.c.h.b16 %v671
        %v1007 = vunpack.c.l.b16 %v672
        %v1008 = vunpack.c.h.b16 %v672
        %v1009 = vunpack.c.l.b16 %v673
        %v1010 = vunpack.c.h.b16 %v673
        %v1011 = vunpack.c.l.b16 %v674
        %v1012 = vunpack.c.h.b16 %v674
        %v1013 = vunpack.c.l.b16 %v675
        %v1014 = vunpack.c.h.b16 %v675
        %v1015 = vunpack.c.l.b16 %v676
        %v1016 = vunpack.c.h.b16 %v676
        %v1017 = vunpack.c.l.b16 %v677
        %v1018 = vunpack.c.h.b16 %v677
        %v1019 = vunpack.c.l.b16 %v678
        %v1020 = vunpack.c.h.b16 %v678
        %v1021 = vunpack.c.l.b16 %v679
        %v1022 = vunpack.c.h.b16 %v679
        %v1023 = vunpack.c.l.b16 %v680
        %v1024 = vunpack.c.h.b16 %v680
        %v1025 = vunpack.c.l.b16 %v681
        %v1026 = vunpack.c.h.b16 %v681
        %v1027 = vunpack.c.l.b16 %v682
        %v1028 = vunpack.c.h.b16 %v682
        %v1029 = vunpack.c.l.b16 %v683
        %v1030 = vunpack.c.h.b16 %v683
        %v1031 = vunpack.c.l.b16 %v684
        %v1032 = vunpack.c.h.b16 %v684
        %v1033 = vunpack.c.l.b16 %v685
        %v1034 = vunpack.c.h.b16 %v685
        %v1035 = vunpack.c.l.b16 %v686
        %v1036 = vunpack.c.h.b16 %v686
        %v1037 = vunpack.c.l.b16 %v687
        %v1038 = vunpack.c.h.b16 %v687
        %v1039 = vunpack.c.l.b16 %v688
        %v1040 = vunpack.c.h.b16 %v688
        %v1041 = vunpack.c.l.b16 %v689
        %v1042 = vunpack.c.h.b16 %v689
        %v1043 = vunpack.c.l.b16 %v690
        %v1044 = vunpack.c.h.b16 %v690
        %v1045 = vunpack.c.l.b16 %v691
        %v1046 = vunpack.c.h.b16 %v691
        %v1047 = vunpack.c.l.b16 %v692
        %v1048 = vunpack.c.h.b16 %v692
        %v1049 = vunpack.c.l.b16 %v693
        %v1050 = vunpack.c.h.b16 %v693
        %v1051 = vunpack.c.l.b16 %v694
        %v1052 = vunpack.c.h.b16 %v694
        %v1053 = vunpack.c.l.b16 %v695
        %v1054 = vunpack.c.h.b16 %v695
        %v1055 = vunpack.c.l.b16 %v696
        %v1056 = vunpack.c.h.b16 %v696
        %v1057 = vunpack.c.l.b16 %v697
        %v1058 = vunpack.c.h.b16 %v697
        %v1059 = vunpack.c.l.b16 %v698
        %v1060 = vunpack.c.h.b16 %v698
        %v1061 = vunpack.c.l.b16 %v699
        %v1062 = vunpack.c.h.b16 %v699
        %v1063 = vunpack.c.l.b16 %v700
        %v1064 = vunpack.c.h.b16 %v700
        %v1065 = vunpack.c.l.b16 %v701
        %v1066 = vunpack.c.h.b16 %v701
        %v1067 = vunpack.c.l.b16 %v702
        %v1068 = vunpack.c.h.b16 %v702
        %v1069 = vunpack.c.l.b16 %v703
        %v1070 = vunpack.c.h.b16 %v703
        %v1071 = vunpack.c.l.b16 %v704
        %v1072 = vunpack.c.h.b16 %v704
        %v1073 = vunpack.c.l.b16 %v705
        %v1074 = vunpack.c.h.b16 %v705
        %v1075 = vunpack.c.l.b16 %v706
        %v1076 = vunpack.c.h.b16 %v706
        %v1077 = vunpack.c.l.b16 %v707
        %v1078 = vunpack.c.h.b16 %v707
        %v1079 = vunpack.c.l.b16 %v708
        %v1080 = vunpack.c.h.b16 %v708
        %v1081 = vunpack.c.l.b16 %v709
        %v1082 = vunpack.c.h.b16 %v709
        %v1083 = vunpack.c.l.b16 %v710
        %v1084 = vunpack.c.h.b16 %v710
        %v1085 = vunpack.c.l.b16 %v711
        %v1086 = vunpack.c.h.b16 %v711
        %v1087 = vunpack.c.l.b16 %v712
        %v1088 = vunpack.c.h.b16 %v712
        %v1089 = vunpack.c.l.b16 %v713
        %v1090 = vunpack.c.h.b16 %v713
        %v1091 = vunpack.c.l.b16 %v714
        %v1092 = vunpack.c.h.b16 %v714
        %v1093 = vunpack.c.l.b16 %v715
        %v1094 = vunpack.c.h.b16 %v715
        %v1095 = vunpack.c.l.b16 %v716
        %v1096 = vunpack.c.h.b16 %v716
        %v1097 = vunpack.c.l.b16 %v717
        %v1098 = vunpack.c.h.b16 %v717
        %v1099 = vunpack.c.l.b16 %v718
        %v1100 = vunpack.c.h.b16 %v718
        %v1101 = vunpack.c.l.b16 %v719
        %v1102 = vunpack.c.h.b16 %v719
        %v1103 = vunpack.c.l.b16 %v720
        %v1104 = vunpack.c.h.b16 %v720
        %v1105 = vunpack.c.l.b16 %v721
        %v1106 = vunpack.c.h.b16 %v721
        %v1107 = vunpack.c.l.b16 %v722
        %v1108 = vunpack.c.h.b16 %v722
        %v1109 = vunpack.c.l.b16 %v723
        %v1110 = vunpack.c.h.b16 %v723
        %v1111 = vunpack.c.l.b16 %v724
        %v1112 = vunpack.c.h.b16 %v724
        %v1113 = vunpack.c.l.b16 %v725
        %v1114 = vunpack.c.h.b16 %v725
        %v1115 = vunpack.c.l.b16 %v726
        %v1116 = vunpack.c.h.b16 %v726
        %v1117 = vunpack.c.l.b16 %v727
        %v1118 = vunpack.c.h.b16 %v727
        %v1119 = vunpack.c.l.b16 %v728
        %v1120 = vunpack.c.h.b16 %v728
        %v1121 = vunpack.c.l.b16 %v729
        %v1122 = vunpack.c.h.b16 %v729
        %v1123 = vunpack.c.l.b16 %v730
        %v1124 = vunpack.c.h.b16 %v730
        %v1125 = vunpack.c.l.b16 %v731
        %v1126 = vunpack.c.h.b16 %v731
        %v1127 = vunpack.c.l.b16 %v732
        %v1128 = vunpack.c.h.b16 %v732
        %v1129 = vunpack.c.l.b16 %v733
        %v1130 = vunpack.c.h.b16 %v733
        %v1131 = vunpack.c.l.b16 %v734
        %v1132 = vunpack.c.h.b16 %v734
        %v1133 = vunpack.c.l.b16 %v735
        %v1134 = vunpack.c.h.b16 %v735
        %v1135 = vunpack.c.l.b16 %v736
        %v1136 = vunpack.c.h.b16 %v736
        %v1137 = vunpack.c.l.b16 %v737
        %v1138 = vunpack.c.h.b16 %v737
        %v1139 = vunpack.c.l.b16 %v738
        %v1140 = vunpack.c.h.b16 %v738
        %v1141 = vunpack.c.l.b16 %v739
        %v1142 = vunpack.c.h.b16 %v739
        %v1143 = vunpack.c.l.b16 %v740
        %v1144 = vunpack.c.h.b16 %v740
        %v1145 = vunpack.c.l.b16 %v741
        %v1146 = vunpack.c.h.b16 %v741
        %v1147 = vunpack.c.l.b16 %v742
        %v1148 = vunpack.c.h.b16 %v742
        %v1149 = vunpack.c.l.b16 %v743
        %v1150 = vunpack.c.h.b16 %v743
        %v1151 = vunpack.c.l.b16 %v744
        %v1152 = vunpack.c.h.b16 %v744
        %v1153 = vunpack.c.l.b16 %v745
        %v1154 = vunpack.c.h.b16 %v745
        %v1155 = vunpack.c.l.b16 %v746
        %v1156 = vunpack.c.h.b16 %v746
        %v1157 = vunpack.c.l.b16 %v747
        %v1158 = vunpack.c.h.b16 %v747
        %v1159 = vunpack.c.l.b16 %v748
        %v1160 = vunpack.c.h.b16 %v748
        %v1161 = vunpack.c.l.b16 %v749
        %v1162 = vunpack.c.h.b16 %v749
        %v1163 = vunpack.c.l.b16 %v750
        %v1164 = vunpack.c.h.b16 %v750
        %v1165 = vpack.c.b16 %v891, %v889
        %v1166 = vpack.c.b16 %v892, %v890
        %v1167 = vpack.c.b16 %v895, %v893
        %v1168 = vpack.c.b16 %v896, %v894
        %v1169 = vpack.c.b16 %v899, %v897
        %v1170 = vpack.c.b16 %v900, %v898
        %v1171 = vpack.c.b16 %v903, %v901
        %v1172 = vpack.c.b16 %v904, %v902
        %v1173 = vpack.c.b16 %v907, %v905
        %v1174 = vpack.c.b16 %v908, %v906
        %v1175 = vpack.c.b16 %v911, %v909
        %v1176 = vpack.c.b16 %v912, %v910
        %v1177 = vpack.c.b16 %v915, %v913
        %v1178 = vpack.c.b16 %v916, %v914
        %v1179 = vpack.c.b16 %v919, %v917
        %v1180 = vpack.c.b16 %v920, %v918
        %v1181 = vpack.c.b16 %v923, %v921
        %v1182 = vpack.c.b16 %v924, %v922
        %v1183 = vpack.c.b16 %v927, %v925
        %v1184 = vpack.c.b16 %v928, %v926
        %v1185 = vpack.c.b16 %v931, %v929
        %v1186 = vpack.c.b16 %v932, %v930
        %v1187 = vpack.c.b16 %v935, %v933
        %v1188 = vpack.c.b16 %v936, %v934
        %v1189 = vpack.c.b16 %v939, %v937
        %v1190 = vpack.c.b16 %v940, %v938
        %v1191 = vpack.c.b16 %v943, %v941
        %v1192 = vpack.c.b16 %v944, %v942
        %v1193 = vpack.c.b16 %v947, %v945
        %v1194 = vpack.c.b16 %v948, %v946
        %v1195 = vpack.c.b16 %v951, %v949
        %v1196 = vpack.c.b16 %v952, %v950
        %v1197 = vpack.c.b16 %v955, %v953
        %v1198 = vpack.c.b16 %v956, %v954
        %v1199 = vpack.c.b16 %v959, %v957
        %v1200 = vpack.c.b16 %v960, %v958
        %v1201 = vpack.c.b16 %v963, %v961
        %v1202 = vpack.c.b16 %v964, %v962
        %v1203 = vpack.c.b16 %v967, %v965
        %v1204 = vpack.c.b16 %v968, %v966
        %v1205 = vpack.c.b16 %v971, %v969
        %v1206 = vpack.c.b16 %v972, %v970
        %v1207 = vpack.c.b16 %v975, %v973
        %v1208 = vpack.c.b16 %v976, %v974
        %v1209 = vpack.c.b16 %v979, %v977
        %v1210 = vpack.c.b16 %v980, %v978
        %v1211 = vpack.c.b16 %v983, %v981
        %v1212 = vpack.c.b16 %v984, %v982
        %v1213 = vpack.c.b16 %v987, %v985
        %v1214 = vpack.c.b16 %v988, %v986
        %v1215 = vpack.c.b16 %v991, %v989
        %v1216 = vpack.c.b16 %v992, %v990
        %v1217 = vpack.c.b16 %v995, %v993
        %v1218 = vpack.c.b16 %v996, %v994
        %v1219 = vpack.c.b16 %v999, %v997
        %v1220 = vpack.c.b16 %v1000, %v998
        %v1221 = vpack.c.b16 %v1003, %v1001
        %v1222 = vpack.c.b16 %v1004, %v1002
        %v1223 = vpack.c.b16 %v1007, %v1005
        %v1224 = vpack.c.b16 %v1008, %v1006
        %v1225 = vpack.c.b16 %v1011, %v1009
        %v1226 = vpack.c.b16 %v1012, %v1010
        %v1227 = vpack.c.b16 %v1015, %v1013
        %v1228 = vpack.c.b16 %v1016, %v1014
        %v1229 = vpack.c.b16 %v1019, %v1017
        %v1230 = vpack.c.b16 %v1020, %v1018
        %v1231 = vpack.c.b16 %v1023, %v1021
        %v1232 = vpack.c.b16 %v1024, %v1022
        %v1233 = vpack.c.b16 %v1027, %v1025
        %v1234 = vpack.c.b16 %v1028, %v1026
        %v1235 = vpack.c.b16 %v1031, %v1029
        %v1236 = vpack.c.b16 %v1032, %v1030
        %v1237 = vpack.c.b16 %v1035, %v1033
        %v1238 = vpack.c.b16 %v1036, %v1034
        %v1239 = vpack.c.b16 %v1039, %v1037
        %v1240 = vpack.c.b16 %v1040, %v1038
        %v1241 = vpack.c.b16 %v1043, %v1041
        %v1242 = vpack.c.b16 %v1044, %v1042
        %v1243 = vpack.c.b16 %v1047, %v1045
        %v1244 = vpack.c.b16 %v1048, %v1046
        %v1245 = vpack.c.b16 %v1051, %v1049
        %v1246 = vpack.c.b16 %v1052, %v1050
        %v1247 = vpack.c.b16 %v1055, %v1053
        %v1248 = vpack.c.b16 %v1056, %v1054
        %v1249 = vpack.c.b16 %v1059, %v1057
        %v1250 = vpack.c.b16 %v1060, %v1058
        %v1251 = vpack.c.b16 %v1063, %v1061
        %v1252 = vpack.c.b16 %v1064, %v1062
        %v1253 = vpack.c.b16 %v1067, %v1065
        %v1254 = vpack.c.b16 %v1068, %v1066
        %v1255 = vpack.c.b16 %v1071, %v1069
        %v1256 = vpack.c.b16 %v1072, %v1070
        %v1257 = vpack.c.b16 %v1075, %v1073
        %v1258 = vpack.c.b16 %v1076, %v1074
        %v1259 = vpack.c.b16 %v1079, %v1077
        %v1260 = vpack.c.b16 %v1080, %v1078
        %v1261 = vpack.c.b16 %v1083, %v1081
        %v1262 = vpack.c.b16 %v1084, %v1082
        %v1263 = vpack.c.b16 %v1087, %v1085
        %v1264 = vpack.c.b16 %v1088, %v1086
        %v1265 = vpack.c.b16 %v1091, %v1089
        %v1266 = vpack.c.b16 %v1092, %v1090
        %v1267 = vpack.c.b16 %v1095, %v1093
        %v1268 = vpack.c.b16 %v1096, %v1094
        %v1269 = vpack.c.b16 %v1099, %v1097
        %v1270 = vpack.c.b16 %v1100, %v1098
        %v1271 = vpack.c.b16 %v1103, %v1101
        %v1272 = vpack.c.b16 %v1104, %v1102
        %v1273 = vpack.c.b16 %v1107, %v1105
        %v1274 = vpack.c.b16 %v1108, %v1106
        %v1275 = vpack.c.b16 %v1111, %v1109
        %v1276 = vpack.c.b16 %v1112, %v1110
        %v1277 = vpack.c.b16 %v1115, %v1113
        %v1278 = vpack.c.b16 %v1116, %v1114
        %v1279 = vpack.c.b16 %v1119, %v1117
        %v1280 = vpack.c.b16 %v1120, %v1118
        %v1281 = vpack.c.b16 %v1123, %v1121
        %v1282 = vpack.c.b16 %v1124, %v1122
        %v1283 = vpack.c.b16 %v1127, %v1125
        %v1284 = vpack.c.b16 %v1128, %v1126
        %v1285 = vpack.c.b16 %v1131, %v1129
        %v1286 = vpack.c.b16 %v1132, %v1130
        %v1287 = vpack.c.b16 %v1135, %v1133
        %v1288 = vpack.c.b16 %v1136, %v1134
        %v1289 = vpack.c.b16 %v1139, %v1137
        %v1290 = vpack.c.b16 %v1140, %v1138
        %v1291 = vpack.c.b16 %v1143, %v1141
        %v1292 = vpack.c.b16 %v1144, %v1142
        %v1293 = vpack.c.b16 %v1147, %v1145
        %v1294 = vpack.c.b16 %v1148, %v1146
        %v1295 = vpack.c.b16 %v1151, %v1149
        %v1296 = vpack.c.b16 %v1152, %v1150
        %v1297 = vpack.c.b16 %v1155, %v1153
        %v1298 = vpack.c.b16 %v1156, %v1154
        %v1299 = vpack.c.b16 %v1159, %v1157
        %v1300 = vpack.c.b16 %v1160, %v1158
        %v1301 = vpack.c.b16 %v1163, %v1161
        %v1302 = vpack.c.b16 %v1164, %v1162
        %vm1439 = vcmask 637952
        %v1440 = vsel %vm1439, %v612, 0
        %v1443 = vsel %vm1439, %v568, 0
        %vm1445 = vcmask 1046528
        %v1447 = vsel %vm1445, %v1301, 0
        %v1450 = vsel %vm1445, %v1302, 0
        %1452 = vmatprep.subr.bf16.mxu0 %v1180
        %1453 = vmatpush1.bf16.msra.mxu0 %v1179
        %1454 = vmatprep.subr.bf16.mxu0 %v1178
        %1455 = vmatpush1.bf16.msra.mxu0 %v1177
        %1456 = vmatprep.subr.bf16.mxu0 %v1176
        %1457 = vmatpush1.bf16.msra.mxu0 %v1175
        %1458 = vmatprep.subr.bf16.mxu0 %v1174
        %1459 = vmatpush1.bf16.msra.mxu0 %v1173
        %1460 = vmatprep.subr.bf16.mxu0 %v1172
        %1461 = vmatpush1.bf16.msra.mxu0 %v1171
        %1462 = vmatprep.subr.bf16.mxu0 %v1170
        %1463 = vmatpush1.bf16.msra.mxu0 %v1169
        %1464 = vmatprep.subr.bf16.mxu0 %v1168
        %1465 = vmatpush1.bf16.msra.mxu0 %v1167
        %1466 = vmatprep.subr.bf16.mxu0 %v1166
        %1467 = vmatpush1.bf16.msra.mxu0 %v1165
        %1468 = vmatprep.subr.bf16.mxu0 %v1196
        %1469 = vmatpush2.bf16.msra.mxu0 %v1195
        %1470 = vmatprep.subr.bf16.mxu0 %v1194
        %1471 = vmatpush2.bf16.msra.mxu0 %v1193
        %1472 = vmatprep.subr.bf16.mxu0 %v1192
        %1473 = vmatpush2.bf16.msra.mxu0 %v1191
        %1474 = vmatprep.subr.bf16.mxu0 %v1190
        %1475 = vmatpush2.bf16.msra.mxu0 %v1189
        %1476 = vmatprep.subr.bf16.mxu0 %v1188
        %1477 = vmatpush2.bf16.msra.mxu0 %v1187
        %1478 = vmatprep.subr.bf16.mxu0 %v1186
        %1479 = vmatpush2.bf16.msra.mxu0 %v1185
        %1480 = vmatprep.subr.bf16.mxu0 %v1184
        %1481 = vmatpush2.bf16.msra.mxu0 %v1183
        %1482 = vmatprep.subr.bf16.mxu0 %v1182
        %1483 = vmatpush2.bf16.msra.mxu0 %v1181
        %1484 = vmatprep.mubr.bf16.mxu0 %v584
        %1485 = vmatmul.mubr.bf16.gmra.mxu0 %v580
        %v1486 = vpop.f32.mrf.mxu0
        %v1487 = vadd.f32 0.0, %v1486
        %v1488 = vpop.f32.mrf.mxu0
        %v1489 = vadd.f32 0.0, %v1488
        %v1490 = vpop.f32.mrf.mxu0
        %v1491 = vadd.f32 0.0, %v1490
        %v1492 = vpop.f32.mrf.mxu0
        %v1493 = vadd.f32 0.0, %v1492
        %1494 = vmatprep.mubr.bf16.mxu0 %v561
        %1495 = vmatmul.mubr.bf16.gmra.mxu0 %v560
        %v1496 = vpop.f32.mrf.mxu0
        %v1497 = vadd.f32 0.0, %v1496
        %v1498 = vpop.f32.mrf.mxu0
        %v1499 = vadd.f32 0.0, %v1498
        %v1500 = vpop.f32.mrf.mxu0
        %v1501 = vpop.f32.mrf.mxu0
        %1502 = vdwg.mxu0
        %1503 = vmatprep.subr.bf16.mxu0 %v1212
        %1504 = vmatpush1.bf16.msra.mxu0 %v1211
        %1505 = vmatprep.subr.bf16.mxu0 %v1210
        %1506 = vmatpush1.bf16.msra.mxu0 %v1209
        %1507 = vmatprep.subr.bf16.mxu0 %v1208
        %1508 = vmatpush1.bf16.msra.mxu0 %v1207
        %1509 = vmatprep.subr.bf16.mxu0 %v1206
        %1510 = vmatpush1.bf16.msra.mxu0 %v1205
        %1511 = vmatprep.subr.bf16.mxu0 %v1204
        %1512 = vmatpush1.bf16.msra.mxu0 %v1203
        %1513 = vmatprep.subr.bf16.mxu0 %v1202
        %1514 = vmatpush1.bf16.msra.mxu0 %v1201
        %1515 = vmatprep.subr.bf16.mxu0 %v1200
        %1516 = vmatpush1.bf16.msra.mxu0 %v1199
        %1517 = vmatprep.subr.bf16.mxu0 %v1198
        %1518 = vmatpush1.bf16.msra.mxu0 %v1197
        %1519 = vmatprep.subr.bf16.mxu0 %v1228
        %1520 = vmatpush2.bf16.msra.mxu0 %v1227
        %1521 = vmatprep.subr.bf16.mxu0 %v1226
        %1522 = vmatpush2.bf16.msra.mxu0 %v1225
        %1523 = vmatprep.subr.bf16.mxu0 %v1224
        %1524 = vmatpush2.bf16.msra.mxu0 %v1223
        %1525 = vmatprep.subr.bf16.mxu0 %v1222
        %1526 = vmatpush2.bf16.msra.mxu0 %v1221
        %1527 = vmatprep.subr.bf16.mxu0 %v1220
        %1528 = vmatpush2.bf16.msra.mxu0 %v1219
        %1529 = vmatprep.subr.bf16.mxu0 %v1218
        %1530 = vmatpush2.bf16.msra.mxu0 %v1217
        %1531 = vmatprep.subr.bf16.mxu0 %v1216
        %1532 = vmatpush2.bf16.msra.mxu0 %v1215
        %1533 = vmatprep.subr.bf16.mxu0 %v1214
        %1534 = vmatpush2.bf16.msra.mxu0 %v1213
        %1535 = vmatprep.mubr.bf16.mxu0 %v592
        %1536 = vmatmul.mubr.bf16.gmra.mxu0 %v588
        %v1537 = vpop.f32.mrf.mxu0
        %v1538 = vadd.f32 %v1487, %v1537
        %v1539 = vpop.f32.mrf.mxu0
        %v1540 = vadd.f32 %v1489, %v1539
        %v1541 = vpop.f32.mrf.mxu0
        %v1542 = vadd.f32 %v1491, %v1541
        %v1543 = vpop.f32.mrf.mxu0
        %v1544 = vadd.f32 %v1493, %v1543
        %1545 = vmatprep.mubr.bf16.mxu0 %v563
        %1546 = vmatmul.mubr.bf16.gmra.mxu0 %v562
        %v1547 = vpop.f32.mrf.mxu0
        %v1548 = vadd.f32 %v1497, %v1547
        %v1549 = vpop.f32.mrf.mxu0
        %v1550 = vadd.f32 %v1499, %v1549
        %v1551 = vpop.f32.mrf.mxu0
        %v1552 = vpop.f32.mrf.mxu0
        %1553 = vdwg.mxu0
        %1554 = vmatprep.subr.bf16.mxu0 %v1244
        %1555 = vmatpush1.bf16.msra.mxu0 %v1243
        %1556 = vmatprep.subr.bf16.mxu0 %v1242
        %1557 = vmatpush1.bf16.msra.mxu0 %v1241
        %1558 = vmatprep.subr.bf16.mxu0 %v1240
        %1559 = vmatpush1.bf16.msra.mxu0 %v1239
        %1560 = vmatprep.subr.bf16.mxu0 %v1238
        %1561 = vmatpush1.bf16.msra.mxu0 %v1237
        %1562 = vmatprep.subr.bf16.mxu0 %v1236
        %1563 = vmatpush1.bf16.msra.mxu0 %v1235
        %1564 = vmatprep.subr.bf16.mxu0 %v1234
        %1565 = vmatpush1.bf16.msra.mxu0 %v1233
        %1566 = vmatprep.subr.bf16.mxu0 %v1232
        %1567 = vmatpush1.bf16.msra.mxu0 %v1231
        %1568 = vmatprep.subr.bf16.mxu0 %v1230
        %1569 = vmatpush1.bf16.msra.mxu0 %v1229
        %1570 = vmatprep.subr.bf16.mxu0 %v1260
        %1571 = vmatpush2.bf16.msra.mxu0 %v1259
        %1572 = vmatprep.subr.bf16.mxu0 %v1258
        %1573 = vmatpush2.bf16.msra.mxu0 %v1257
        %1574 = vmatprep.subr.bf16.mxu0 %v1256
        %1575 = vmatpush2.bf16.msra.mxu0 %v1255
        %1576 = vmatprep.subr.bf16.mxu0 %v1254
        %1577 = vmatpush2.bf16.msra.mxu0 %v1253
        %1578 = vmatprep.subr.bf16.mxu0 %v1252
        %1579 = vmatpush2.bf16.msra.mxu0 %v1251
        %1580 = vmatprep.subr.bf16.mxu0 %v1250
        %1581 = vmatpush2.bf16.msra.mxu0 %v1249
        %1582 = vmatprep.subr.bf16.mxu0 %v1248
        %1583 = vmatpush2.bf16.msra.mxu0 %v1247
        %1584 = vmatprep.subr.bf16.mxu0 %v1246
        %1585 = vmatpush2.bf16.msra.mxu0 %v1245
        %1586 = vmatprep.mubr.bf16.mxu0 %v600
        %1587 = vmatmul.mubr.bf16.gmra.mxu0 %v596
        %v1588 = vpop.f32.mrf.mxu0
        %v1589 = vadd.f32 %v1538, %v1588
        %v1590 = vpop.f32.mrf.mxu0
        %v1591 = vadd.f32 %v1540, %v1590
        %v1592 = vpop.f32.mrf.mxu0
        %v1593 = vadd.f32 %v1542, %v1592
        %v1594 = vpop.f32.mrf.mxu0
        %v1595 = vadd.f32 %v1544, %v1594
        %1596 = vmatprep.mubr.bf16.mxu0 %v565
        %1597 = vmatmul.mubr.bf16.gmra.mxu0 %v564
        %v1598 = vpop.f32.mrf.mxu0
        %v1599 = vadd.f32 %v1548, %v1598
        %v1600 = vpop.f32.mrf.mxu0
        %v1601 = vadd.f32 %v1550, %v1600
        %v1602 = vpop.f32.mrf.mxu0
        %v1603 = vpop.f32.mrf.mxu0
        %1604 = vdwg.mxu0
        %1605 = vmatprep.subr.bf16.mxu0 %v1276
        %1606 = vmatpush1.bf16.msra.mxu0 %v1275
        %1607 = vmatprep.subr.bf16.mxu0 %v1274
        %1608 = vmatpush1.bf16.msra.mxu0 %v1273
        %1609 = vmatprep.subr.bf16.mxu0 %v1272
        %1610 = vmatpush1.bf16.msra.mxu0 %v1271
        %1611 = vmatprep.subr.bf16.mxu0 %v1270
        %1612 = vmatpush1.bf16.msra.mxu0 %v1269
        %1613 = vmatprep.subr.bf16.mxu0 %v1268
        %1614 = vmatpush1.bf16.msra.mxu0 %v1267
        %1615 = vmatprep.subr.bf16.mxu0 %v1266
        %1616 = vmatpush1.bf16.msra.mxu0 %v1265
        %1617 = vmatprep.subr.bf16.mxu0 %v1264
        %1618 = vmatpush1.bf16.msra.mxu0 %v1263
        %1619 = vmatprep.subr.bf16.mxu0 %v1262
        %1620 = vmatpush1.bf16.msra.mxu0 %v1261
        %1621 = vmatprep.subr.bf16.mxu0 %v1292
        %1622 = vmatpush2.bf16.msra.mxu0 %v1291
        %1623 = vmatprep.subr.bf16.mxu0 %v1290
        %1624 = vmatpush2.bf16.msra.mxu0 %v1289
        %1625 = vmatprep.subr.bf16.mxu0 %v1288
        %1626 = vmatpush2.bf16.msra.mxu0 %v1287
        %1627 = vmatprep.subr.bf16.mxu0 %v1286
        %1628 = vmatpush2.bf16.msra.mxu0 %v1285
        %1629 = vmatprep.subr.bf16.mxu0 %v1284
        %1630 = vmatpush2.bf16.msra.mxu0 %v1283
        %1631 = vmatprep.subr.bf16.mxu0 %v1282
        %1632 = vmatpush2.bf16.msra.mxu0 %v1281
        %1633 = vmatprep.subr.bf16.mxu0 %v1280
        %1634 = vmatpush2.bf16.msra.mxu0 %v1279
        %1635 = vmatprep.subr.bf16.mxu0 %v1278
        %1636 = vmatpush2.bf16.msra.mxu0 %v1277
        %1637 = vmatprep.mubr.bf16.mxu0 %v608
        %1638 = vmatmul.mubr.bf16.gmra.mxu0 %v604
        %v1639 = vpop.f32.mrf.mxu0
        %v1640 = vadd.f32 %v1589, %v1639
        %v1641 = vpop.f32.mrf.mxu0
        %v1642 = vadd.f32 %v1591, %v1641
        %v1643 = vpop.f32.mrf.mxu0
        %v1644 = vadd.f32 %v1593, %v1643
        %v1645 = vpop.f32.mrf.mxu0
        %v1646 = vadd.f32 %v1595, %v1645
        %1647 = vmatprep.mubr.bf16.mxu0 %v567
        %1648 = vmatmul.mubr.bf16.gmra.mxu0 %v566
        %v1649 = vpop.f32.mrf.mxu0
        %v1650 = vadd.f32 %v1599, %v1649
        %v1651 = vpop.f32.mrf.mxu0
        %v1652 = vadd.f32 %v1601, %v1651
        %v1653 = vpop.f32.mrf.mxu0
        %v1654 = vpop.f32.mrf.mxu0
        %1655 = vdwg.mxu0
        %1656 = vmatprep.subr.bf16.mxu0 0
        %1657 = vmatpush1.bf16.msra.mxu0 0
        %1658 = vmatprep.subr.bf16.mxu0 0
        %1659 = vmatpush1.bf16.msra.mxu0 0
        %1660 = vmatprep.subr.bf16.mxu0 0
        %1661 = vmatpush1.bf16.msra.mxu0 0
        %1662 = vmatprep.subr.bf16.mxu0 %v1450
        %1663 = vmatpush1.bf16.msra.mxu0 %v1447
        %1664 = vmatprep.subr.bf16.mxu0 %v1300
        %1665 = vmatpush1.bf16.msra.mxu0 %v1299
        %1666 = vmatprep.subr.bf16.mxu0 %v1298
        %1667 = vmatpush1.bf16.msra.mxu0 %v1297
        %1668 = vmatprep.subr.bf16.mxu0 %v1296
        %1669 = vmatpush1.bf16.msra.mxu0 %v1295
        %1670 = vmatprep.subr.bf16.mxu0 %v1294
        %1671 = vmatpush1.bf16.msra.mxu0 %v1293
        %1672 = vmatprep.subr.bf16.mxu0 0
        %1673 = vmatpush2.bf16.msra.mxu0 0
        %1674 = vmatprep.subr.bf16.mxu0 0
        %1675 = vmatpush2.bf16.msra.mxu0 0
        %1676 = vmatprep.subr.bf16.mxu0 0
        %1677 = vmatpush2.bf16.msra.mxu0 0
        %1678 = vmatprep.subr.bf16.mxu0 0
        %1679 = vmatpush2.bf16.msra.mxu0 0
        %1680 = vmatprep.subr.bf16.mxu0 0
        %1681 = vmatpush2.bf16.msra.mxu0 0
        %1682 = vmatprep.subr.bf16.mxu0 0
        %1683 = vmatpush2.bf16.msra.mxu0 0
        %1684 = vmatprep.subr.bf16.mxu0 0
        %1685 = vmatpush2.bf16.msra.mxu0 0
        %1686 = vmatprep.subr.bf16.mxu0 0
        %1687 = vmatpush2.bf16.msra.mxu0 0
        %1688 = vmatprep.mubr.bf16.mxu0 0
        %1689 = vmatmul.mubr.bf16.gmra.mxu0 %v1440
        %v1690 = vpop.f32.mrf.mxu0
        %v1691 = vadd.f32 %v1640, %v1690
        %v1692 = vpop.f32.mrf.mxu0
        %v1693 = vadd.f32 %v1642, %v1692
        %v1694 = vpop.f32.mrf.mxu0
        %v1695 = vadd.f32 %v1644, %v1694
        %v1696 = vpop.f32.mrf.mxu0
        %v1697 = vadd.f32 %v1646, %v1696
        %1698 = vmatprep.mubr.bf16.mxu0 0
        %1699 = vmatmul.mubr.bf16.gmra.mxu0 %v1443
        %v1700 = vpop.f32.mrf.mxu0
        %v1701 = vadd.f32 %v1650, %v1700
        %v1702 = vpop.f32.mrf.mxu0
        %v1703 = vadd.f32 %v1652, %v1702
        %v1704 = vpop.f32.mrf.mxu0
        %v1705 = vpop.f32.mrf.mxu0
        %1706 = vdwg.mxu0
        %vm1707 = vcmp.ge.s32.totalorder %v497, 0
        %vm1708 = vcmp.ge.s32.totalorder %v498, 0
        %vm1709 = vcmp.ge.s32.totalorder %v499, 0
        %vm1710 = vcmp.lt.s32.totalorder %v497, 16
        %vm1711 = vcmp.lt.s32.totalorder %v498, 16
        %vm1712 = vcmp.lt.s32.totalorder %v499, 16
        %vm1713 = vmand %vm1707, %vm1710
        %vm1714 = vmand %vm1708, %vm1711
        %vm1715 = vmand %vm1709, %vm1712
        %v1716 = vsel %vm1713, 1, 0
        %v1717 = vsel %vm1714, 1, 0
        %v1718 = vsel %vm1715, 1, 0
        %vm1719 = vcmp.eq.s32.totalorder %v1716, 1
        %vm1720 = vcmp.eq.s32.totalorder %v1717, 1
        %vm1721 = vcmp.eq.s32.totalorder %v1718, 1
        %v1722 = vsel %vm1719, %v1691, 0.0
        %v1723 = vsel %vm1719, %v1693, 0.0
        %v1724 = vsel %vm1720, %v1695, 0.0
        %v1725 = vsel %vm1720, %v1697, 0.0
        %v1726 = vsel %vm1721, %v1701, 0.0
        %v1727 = vsel %vm1721, %v1703, 0.0
        %v1731 = vrot.slane %v1722, 1
        %v1732 = vrot.slane %v1724, 1
        %v1733 = vsel %vm1445, %v1731, %v1732
        %v1734 = vrot.slane %v1726, 1
        %v1735 = vsel %vm1445, %v1732, %v1734
        %1736 = vrot.lane.b32.xlu0 %v1733, 64
        %v1737 = vpop.permute.xlu0 %1736
        %1738 = vrot.lane.b32.xlu0 %v1735, 64
        %v1739 = vpop.permute.xlu0 %1738
        %1740 = vrot.lane.b32.xlu0 %v1734, 64
        %v1741 = vpop.permute.xlu0 %1740
        %v1745 = vadd.f32 %v1722, %v1737
        %v1746 = vadd.f32 %v1724, %v1739
        %v1747 = vadd.f32 %v1726, %v1741
        %vm1751 = vcmask 1045504
        %v1752 = vrot.slane %v1723, 2
        %v1753 = vrot.slane %v1725, 2
        %v1754 = vsel %vm1751, %v1752, %v1753
        %v1755 = vrot.slane %v1727, 2
        %v1756 = vsel %vm1751, %v1753, %v1755
        %v1760 = vadd.f32 %v1745, %v1754
        %v1761 = vadd.f32 %v1746, %v1756
        %v1762 = vadd.f32 %v1747, %v1755
        %v1763 = vld [vmem:[%s3] sm:$0x1]
        %v1765 = vlaneseq
        %v1766 = vshrl.u32 %v1765, 7
        %v1767 = vsub.s32 0, %v1766
        %v1768 = vrot.slane %v1763, %v1767
        %v1770 = vadd.f32 %v1760, %v1768
        %v1771 = vadd.f32 %v1761, %v1768
        %v1772 = vadd.f32 %v1762, %v1768
        %v1773 = vmax.f32 %v1770, 0.0
        %v1774 = vmax.f32 %v1771, 0.0
        %v1775 = vmax.f32 %v1772, 0.0
        %vm1779 = vcmask 1040384
        %v1780 = vrot.slane %v1773, 7
        %v1781 = vrot.slane %v1774, 7
        %v1782 = vsel %vm1779, %v1780, %v1781
        %v1783 = vrot.slane %v1775, 7
        %v1784 = vsel %vm1779, %v1781, %v1783
        %v1788 = vsel %vm1719, %v1780, 0.0
        %v1789 = vsel %vm1720, %v1782, 0.0
        %v1790 = vsel %vm1721, %v1784, 0.0
        %v1791 = vpack.c.bf16 %v1789, %v1788
        %v1792 = vpack.c.bf16 %v1790, %v1790
        %v1793 = vld [vmem:[%s4] sm:$0xf]
        %v1794 = vld [vmem:[%s4 + $0x4] sm:$0xf]
        %v1795 = vld [vmem:[%s4 + $0x8] sm:$0xf]
        %v1796 = vld [vmem:[%s4 + $0xc] sm:$0xf]
        %v1797 = vld [vmem:[%s4 + $0x10] sm:$0xf]
        %v1798 = vld [vmem:[%s4 + $0x14] sm:$0xf]
        %v1799 = vld [vmem:[%s4 + $0x18] sm:$0xf]
        %v1800 = vld [vmem:[%s4 + $0x1c] sm:$0xf]
        %s1801 = scalar_lea.vmem %s4, 32
        %v1802 = vld [vmem:[%s1801] sm:$0xf]
        %v1803 = vld [vmem:[%s1801 + $0x4] sm:$0xf]
        %v1804 = vld [vmem:[%s1801 + $0x8] sm:$0xf]
        %v1805 = vld [vmem:[%s1801 + $0xc] sm:$0xf]
        %v1806 = vld [vmem:[%s1801 + $0x10] sm:$0xf]
        %v1807 = vld [vmem:[%s1801 + $0x14] sm:$0xf]
        %v1808 = vld [vmem:[%s1801 + $0x18] sm:$0xf]
        %v1809 = vld [vmem:[%s1801 + $0x1c] sm:$0xf]
        %vm1812 = vcmask 1044480
        %v1813 = vrot.slane %v1791, 3
        %v1814 = vrot.slane %v1792, 3
        %v1815 = vsel %vm1812, %v1813, %v1814
        %v1824 = vunpack.c.l.b16 %v1802
        %v1825 = vunpack.c.l.b16 %v1803
        %v1826 = vunpack.c.l.b16 %v1804
        %v1827 = vunpack.c.l.b16 %v1805
        %v1828 = vunpack.c.l.b16 %v1806
        %v1829 = vunpack.c.l.b16 %v1807
        %v1830 = vunpack.c.l.b16 %v1808
        %v1831 = vunpack.c.l.b16 %v1809
        %v1832 = vpack.c.b16 %v1825, %v1824
        %v1833 = vpack.c.b16 %v1827, %v1826
        %v1834 = vpack.c.b16 %v1829, %v1828
        %v1835 = vpack.c.b16 %v1831, %v1830
        %vm1840 = vcmask 523264
        %v1842 = vsel %vm1840, %v1815, 0
        %1844 = vmatprep.subr.bf16.mxu0 0
        %1845 = vmatpush1.bf16.msra.mxu0 0
        %1846 = vmatprep.subr.bf16.mxu0 0
        %1847 = vmatpush1.bf16.msra.mxu0 0
        %1848 = vmatprep.subr.bf16.mxu0 0
        %1849 = vmatpush1.bf16.msra.mxu0 0
        %1850 = vmatprep.subr.bf16.mxu0 0
        %1851 = vmatpush1.bf16.msra.mxu0 0
        %1852 = vmatprep.subr.bf16.mxu0 0
        %1853 = vmatpush1.bf16.msra.mxu0 %v1835
        %1854 = vmatprep.subr.bf16.mxu0 0
        %1855 = vmatpush1.bf16.msra.mxu0 %v1834
        %1856 = vmatprep.subr.bf16.mxu0 0
        %1857 = vmatpush1.bf16.msra.mxu0 %v1833
        %1858 = vmatprep.subr.bf16.mxu0 0
        %1859 = vmatpush1.bf16.msra.mxu0 %v1832
        %1860 = vmatprep.subr.bf16.mxu0 0
        %1861 = vmatpush2.bf16.msra.mxu0 0
        %1862 = vmatprep.subr.bf16.mxu0 0
        %1863 = vmatpush2.bf16.msra.mxu0 0
        %1864 = vmatprep.subr.bf16.mxu0 0
        %1865 = vmatpush2.bf16.msra.mxu0 0
        %1866 = vmatprep.subr.bf16.mxu0 0
        %1867 = vmatpush2.bf16.msra.mxu0 0
        %1868 = vmatprep.subr.bf16.mxu0 0
        %1869 = vmatpush2.bf16.msra.mxu0 0
        %1870 = vmatprep.subr.bf16.mxu0 0
        %1871 = vmatpush2.bf16.msra.mxu0 0
        %1872 = vmatprep.subr.bf16.mxu0 0
        %1873 = vmatpush2.bf16.msra.mxu0 0
        %1874 = vmatprep.subr.bf16.mxu0 0
        %1875 = vmatpush2.bf16.msra.mxu0 0
        %1876 = vmatprep.mubr.bf16.mxu0 0
        %1877 = vmatmul.mubr.bf16.gmra.mxu0 %v1842
        %v1878 = vpop.f32.mrf.mxu0
        %v1879 = vadd.f32 0.0, %v1878
        %v1880 = vpop.f32.mrf.mxu0
        %v1881 = vpop.f32.mrf.mxu0
        %v1882 = vadd.f32 0.0, %v1881
        %v1883 = vpop.f32.mrf.mxu0
        %1884 = vdwg.mxu0
        %vm1885 = vsmask.f32 5376
        %v1887 = vshrl.u32 %v1791, 16
        %v1889 = vrot.slane %v1887, 2
        %v1890 = vshll.u32 %v1791, 16
        %v1892 = vrot.slane %v1890, 3
        %v1893 = vor.u32 %v1889, %v1892
        %v1895 = vshll.u32 %v1792, 16
        %v1897 = vrot.slane %v1895, 3
        %v1898 = vsel %vm1885, %v1893, %v1897
        %v1907 = vunpack.c.l.b16 %v1793
        %v1908 = vunpack.c.l.b16 %v1794
        %v1909 = vunpack.c.l.b16 %v1795
        %v1910 = vunpack.c.l.b16 %v1796
        %v1911 = vunpack.c.l.b16 %v1797
        %v1912 = vunpack.c.l.b16 %v1798
        %v1913 = vunpack.c.l.b16 %v1799
        %v1914 = vunpack.c.l.b16 %v1800
        %v1915 = vpack.c.b16 %v1908, %v1907
        %v1916 = vpack.c.b16 %v1910, %v1909
        %v1917 = vpack.c.b16 %v1912, %v1911
        %v1918 = vpack.c.b16 %v1914, %v1913
        %v1924 = vsel %vm1840, %v1898, 0
        %1926 = vmatprep.subr.bf16.mxu0 0
        %1927 = vmatpush1.bf16.msra.mxu0 0
        %1928 = vmatprep.subr.bf16.mxu0 0
        %1929 = vmatpush1.bf16.msra.mxu0 0
        %1930 = vmatprep.subr.bf16.mxu0 0
        %1931 = vmatpush1.bf16.msra.mxu0 0
        %1932 = vmatprep.subr.bf16.mxu0 0
        %1933 = vmatpush1.bf16.msra.mxu0 0
        %1934 = vmatprep.subr.bf16.mxu0 0
        %1935 = vmatpush1.bf16.msra.mxu0 %v1918
        %1936 = vmatprep.subr.bf16.mxu0 0
        %1937 = vmatpush1.bf16.msra.mxu0 %v1917
        %1938 = vmatprep.subr.bf16.mxu0 0
        %1939 = vmatpush1.bf16.msra.mxu0 %v1916
        %1940 = vmatprep.subr.bf16.mxu0 0
        %1941 = vmatpush1.bf16.msra.mxu0 %v1915
        %1942 = vmatprep.subr.bf16.mxu0 0
        %1943 = vmatpush2.bf16.msra.mxu0 0
        %1944 = vmatprep.subr.bf16.mxu0 0
        %1945 = vmatpush2.bf16.msra.mxu0 0
        %1946 = vmatprep.subr.bf16.mxu0 0
        %1947 = vmatpush2.bf16.msra.mxu0 0
        %1948 = vmatprep.subr.bf16.mxu0 0
        %1949 = vmatpush2.bf16.msra.mxu0 0
        %1950 = vmatprep.subr.bf16.mxu0 0
        %1951 = vmatpush2.bf16.msra.mxu0 0
        %1952 = vmatprep.subr.bf16.mxu0 0
        %1953 = vmatpush2.bf16.msra.mxu0 0
        %1954 = vmatprep.subr.bf16.mxu0 0
        %1955 = vmatpush2.bf16.msra.mxu0 0
        %1956 = vmatprep.subr.bf16.mxu0 0
        %1957 = vmatpush2.bf16.msra.mxu0 0
        %1958 = vmatprep.mubr.bf16.mxu0 0
        %1959 = vmatmul.mubr.bf16.gmra.mxu0 %v1924
        %v1960 = vpop.f32.mrf.mxu0
        %v1961 = vadd.f32 %v1879, %v1960
        %v1962 = vpop.f32.mrf.mxu0
        %v1963 = vpop.f32.mrf.mxu0
        %v1964 = vadd.f32 %v1882, %v1963
        %v1965 = vpop.f32.mrf.mxu0
        %1966 = vdwg.mxu0
        %s1967 = scalar_lea.vmem %s4, 64
        %v1968 = vld [vmem:[%s1967] sm:$0xf]
        %v1969 = vld [vmem:[%s1967 + $0x4] sm:$0xf]
        %v1970 = vld [vmem:[%s1967 + $0x8] sm:$0xf]
        %v1971 = vld [vmem:[%s1967 + $0xc] sm:$0xf]
        %v1972 = vld [vmem:[%s1967 + $0x10] sm:$0xf]
        %v1973 = vld [vmem:[%s1967 + $0x14] sm:$0xf]
        %v1974 = vld [vmem:[%s1967 + $0x18] sm:$0xf]
        %v1975 = vld [vmem:[%s1967 + $0x1c] sm:$0xf]
        %vm1976 = vsmask.f32 4352
        %v1977 = vrot.slane %v1887, 3
        %v1978 = vrot.slane %v1890, 4
        %v1979 = vor.u32 %v1977, %v1978
        %v1980 = vshrl.u32 %v1792, 16
        %v1982 = vrot.slane %v1980, 3
        %v1983 = vrot.slane %v1895, 4
        %v1984 = vor.u32 %v1982, %v1983
        %v1985 = vsel %vm1976, %v1979, %v1984
        %v1994 = vunpack.c.l.b16 %v1968
        %v1995 = vunpack.c.l.b16 %v1969
        %v1996 = vunpack.c.l.b16 %v1970
        %v1997 = vunpack.c.l.b16 %v1971
        %v1998 = vunpack.c.l.b16 %v1972
        %v1999 = vunpack.c.l.b16 %v1973
        %v2000 = vunpack.c.l.b16 %v1974
        %v2001 = vunpack.c.l.b16 %v1975
        %v2002 = vpack.c.b16 %v1995, %v1994
        %v2003 = vpack.c.b16 %v1997, %v1996
        %v2004 = vpack.c.b16 %v1999, %v1998
        %v2005 = vpack.c.b16 %v2001, %v2000
        %v2011 = vsel %vm1840, %v1985, 0
        %2013 = vmatprep.subr.bf16.mxu0 0
        %2014 = vmatpush1.bf16.msra.mxu0 0
        %2015 = vmatprep.subr.bf16.mxu0 0
        %2016 = vmatpush1.bf16.msra.mxu0 0
        %2017 = vmatprep.subr.bf16.mxu0 0
        %2018 = vmatpush1.bf16.msra.mxu0 0
        %2019 = vmatprep.subr.bf16.mxu0 0
        %2020 = vmatpush1.bf16.msra.mxu0 0
        %2021 = vmatprep.subr.bf16.mxu0 0
        %2022 = vmatpush1.bf16.msra.mxu0 %v2005
        %2023 = vmatprep.subr.bf16.mxu0 0
        %2024 = vmatpush1.bf16.msra.mxu0 %v2004
        %2025 = vmatprep.subr.bf16.mxu0 0
        %2026 = vmatpush1.bf16.msra.mxu0 %v2003
        %2027 = vmatprep.subr.bf16.mxu0 0
        %2028 = vmatpush1.bf16.msra.mxu0 %v2002
        %2029 = vmatprep.subr.bf16.mxu0 0
        %2030 = vmatpush2.bf16.msra.mxu0 0
        %2031 = vmatprep.subr.bf16.mxu0 0
        %2032 = vmatpush2.bf16.msra.mxu0 0
        %2033 = vmatprep.subr.bf16.mxu0 0
        %2034 = vmatpush2.bf16.msra.mxu0 0
        %2035 = vmatprep.subr.bf16.mxu0 0
        %2036 = vmatpush2.bf16.msra.mxu0 0
        %2037 = vmatprep.subr.bf16.mxu0 0
        %2038 = vmatpush2.bf16.msra.mxu0 0
        %2039 = vmatprep.subr.bf16.mxu0 0
        %2040 = vmatpush2.bf16.msra.mxu0 0
        %2041 = vmatprep.subr.bf16.mxu0 0
        %2042 = vmatpush2.bf16.msra.mxu0 0
        %2043 = vmatprep.subr.bf16.mxu0 0
        %2044 = vmatpush2.bf16.msra.mxu0 0
        %2045 = vmatprep.mubr.bf16.mxu0 0
        %2046 = vmatmul.mubr.bf16.gmra.mxu0 %v2011
        %v2047 = vpop.f32.mrf.mxu0
        %v2048 = vadd.f32 0.0, %v2047
        %v2049 = vpop.f32.mrf.mxu0
        %v2050 = vpop.f32.mrf.mxu0
        %v2051 = vadd.f32 0.0, %v2050
        %v2052 = vpop.f32.mrf.mxu0
        %2053 = vdwg.mxu0
        %v2054 = vadd.f32 %v1961, %v2048
        %v2055 = vadd.f32 %v1964, %v2051
        %v2056 = vld [vmem:[%s5] sm:$0x1]
        %v2058 = vlaneseq
        %v2059 = vshrl.u32 %v2058, 7
        %v2060 = vsub.s32 0, %v2059
        %v2061 = vrot.slane %v2056, %v2060
        %v2063 = vadd.f32 %v2054, %v2061
        %v2064 = vadd.f32 %v2055, %v2061
        %v2065 = vmax.f32 %v2063, 0.0
        %v2066 = vmax.f32 %v2064, 0.0
        %v2069 = vrot.slane %v2065, 2
        %v2070 = vrot.slane %v2066, 2
        %v2071 = vsel %vm1751, %v2069, %v2070
        %v2075 = vsel %vm1719, %v2069, 0.0
        %v2076 = vsel %vm1720, %v2071, 0.0
        %v2077 = vsel %vm1721, %v2070, 0.0
        %v2078 = vpack.c.bf16 %v2076, %v2075
        %v2079 = vpack.c.bf16 %v2077, %v2077
        %v2080 = vld [vmem:[%s6] sm:$0xf]
        %v2081 = vld [vmem:[%s6 + $0x4] sm:$0xf]
        %v2082 = vld [vmem:[%s6 + $0x8] sm:$0xf]
        %v2083 = vld [vmem:[%s6 + $0xc] sm:$0xf]
        %v2084 = vld [vmem:[%s6 + $0x10] sm:$0xf]
        %v2085 = vld [vmem:[%s6 + $0x14] sm:$0xf]
        %v2086 = vld [vmem:[%s6 + $0x18] sm:$0xf]
        %v2087 = vld [vmem:[%s6 + $0x1c] sm:$0xf]
        %s2088 = scalar_lea.vmem %s6, 32
        %v2089 = vld [vmem:[%s2088] sm:$0xf]
        %v2090 = vld [vmem:[%s2088 + $0x4] sm:$0xf]
        %v2091 = vld [vmem:[%s2088 + $0x8] sm:$0xf]
        %v2092 = vld [vmem:[%s2088 + $0xc] sm:$0xf]
        %v2093 = vld [vmem:[%s2088 + $0x10] sm:$0xf]
        %v2094 = vld [vmem:[%s2088 + $0x14] sm:$0xf]
        %v2095 = vld [vmem:[%s2088 + $0x18] sm:$0xf]
        %v2096 = vld [vmem:[%s2088 + $0x1c] sm:$0xf]
        %v2098 = vshrl.u32 %v2078, 16
        %v2100 = vrot.slane %v2098, 3
        %v2101 = vshll.u32 %v2078, 16
        %v2103 = vrot.slane %v2101, 4
        %v2104 = vor.u32 %v2100, %v2103
        %v2106 = vshll.u32 %v2079, 16
        %v2108 = vrot.slane %v2106, 4
        %v2109 = vsel %vm1976, %v2104, %v2108
        %v2118 = vunpack.c.l.b16 %v2089
        %v2119 = vunpack.c.l.b16 %v2090
        %v2120 = vunpack.c.l.b16 %v2091
        %v2121 = vunpack.c.l.b16 %v2092
        %v2122 = vunpack.c.l.b16 %v2093
        %v2123 = vunpack.c.l.b16 %v2094
        %v2124 = vunpack.c.l.b16 %v2095
        %v2125 = vunpack.c.l.b16 %v2096
        %v2126 = vpack.c.b16 %v2119, %v2118
        %v2127 = vpack.c.b16 %v2121, %v2120
        %v2128 = vpack.c.b16 %v2123, %v2122
        %v2129 = vpack.c.b16 %v2125, %v2124
        %v2135 = vsel %vm1840, %v2109, 0
        %2137 = vmatprep.subr.bf16.mxu0 0
        %2138 = vmatpush1.bf16.msra.mxu0 0
        %2139 = vmatprep.subr.bf16.mxu0 0
        %2140 = vmatpush1.bf16.msra.mxu0 0
        %2141 = vmatprep.subr.bf16.mxu0 0
        %2142 = vmatpush1.bf16.msra.mxu0 0
        %2143 = vmatprep.subr.bf16.mxu0 0
        %2144 = vmatpush1.bf16.msra.mxu0 0
        %2145 = vmatprep.subr.bf16.mxu0 0
        %2146 = vmatpush1.bf16.msra.mxu0 %v2129
        %2147 = vmatprep.subr.bf16.mxu0 0
        %2148 = vmatpush1.bf16.msra.mxu0 %v2128
        %2149 = vmatprep.subr.bf16.mxu0 0
        %2150 = vmatpush1.bf16.msra.mxu0 %v2127
        %2151 = vmatprep.subr.bf16.mxu0 0
        %2152 = vmatpush1.bf16.msra.mxu0 %v2126
        %2153 = vmatprep.subr.bf16.mxu0 0
        %2154 = vmatpush2.bf16.msra.mxu0 0
        %2155 = vmatprep.subr.bf16.mxu0 0
        %2156 = vmatpush2.bf16.msra.mxu0 0
        %2157 = vmatprep.subr.bf16.mxu0 0
        %2158 = vmatpush2.bf16.msra.mxu0 0
        %2159 = vmatprep.subr.bf16.mxu0 0
        %2160 = vmatpush2.bf16.msra.mxu0 0
        %2161 = vmatprep.subr.bf16.mxu0 0
        %2162 = vmatpush2.bf16.msra.mxu0 0
        %2163 = vmatprep.subr.bf16.mxu0 0
        %2164 = vmatpush2.bf16.msra.mxu0 0
        %2165 = vmatprep.subr.bf16.mxu0 0
        %2166 = vmatpush2.bf16.msra.mxu0 0
        %2167 = vmatprep.subr.bf16.mxu0 0
        %2168 = vmatpush2.bf16.msra.mxu0 0
        %2169 = vmatprep.mubr.bf16.mxu0 0
        %2170 = vmatmul.mubr.bf16.gmra.mxu0 %v2135
        %v2171 = vpop.f32.mrf.mxu0
        %v2172 = vadd.f32 0.0, %v2171
        %v2173 = vpop.f32.mrf.mxu0
        %v2174 = vpop.f32.mrf.mxu0
        %v2175 = vadd.f32 0.0, %v2174
        %v2176 = vpop.f32.mrf.mxu0
        %2177 = vdwg.mxu0
        %v2179 = vrot.slane %v2078, 3
        %v2188 = vunpack.c.l.b16 %v2080
        %v2189 = vunpack.c.l.b16 %v2081
        %v2190 = vunpack.c.l.b16 %v2082
        %v2191 = vunpack.c.l.b16 %v2083
        %v2192 = vunpack.c.l.b16 %v2084
        %v2193 = vunpack.c.l.b16 %v2085
        %v2194 = vunpack.c.l.b16 %v2086
        %v2195 = vunpack.c.l.b16 %v2087
        %v2196 = vpack.c.b16 %v2189, %v2188
        %v2197 = vpack.c.b16 %v2191, %v2190
        %v2198 = vpack.c.b16 %v2193, %v2192
        %v2199 = vpack.c.b16 %v2195, %v2194
        %v2205 = vsel %vm1840, %v2179, 0
        %2207 = vmatprep.subr.bf16.mxu0 0
        %2208 = vmatpush1.bf16.msra.mxu0 0
        %2209 = vmatprep.subr.bf16.mxu0 0
        %2210 = vmatpush1.bf16.msra.mxu0 0
        %2211 = vmatprep.subr.bf16.mxu0 0
        %2212 = vmatpush1.bf16.msra.mxu0 0
        %2213 = vmatprep.subr.bf16.mxu0 0
        %2214 = vmatpush1.bf16.msra.mxu0 0
        %2215 = vmatprep.subr.bf16.mxu0 0
        %2216 = vmatpush1.bf16.msra.mxu0 %v2199
        %2217 = vmatprep.subr.bf16.mxu0 0
        %2218 = vmatpush1.bf16.msra.mxu0 %v2198
        %2219 = vmatprep.subr.bf16.mxu0 0
        %2220 = vmatpush1.bf16.msra.mxu0 %v2197
        %2221 = vmatprep.subr.bf16.mxu0 0
        %2222 = vmatpush1.bf16.msra.mxu0 %v2196
        %2223 = vmatprep.subr.bf16.mxu0 0
        %2224 = vmatpush2.bf16.msra.mxu0 0
        %2225 = vmatprep.subr.bf16.mxu0 0
        %2226 = vmatpush2.bf16.msra.mxu0 0
        %2227 = vmatprep.subr.bf16.mxu0 0
        %2228 = vmatpush2.bf16.msra.mxu0 0
        %2229 = vmatprep.subr.bf16.mxu0 0
        %2230 = vmatpush2.bf16.msra.mxu0 0
        %2231 = vmatprep.subr.bf16.mxu0 0
        %2232 = vmatpush2.bf16.msra.mxu0 0
        %2233 = vmatprep.subr.bf16.mxu0 0
        %2234 = vmatpush2.bf16.msra.mxu0 0
        %2235 = vmatprep.subr.bf16.mxu0 0
        %2236 = vmatpush2.bf16.msra.mxu0 0
        %2237 = vmatprep.subr.bf16.mxu0 0
        %2238 = vmatpush2.bf16.msra.mxu0 0
        %2239 = vmatprep.mubr.bf16.mxu0 0
        %2240 = vmatmul.mubr.bf16.gmra.mxu0 %v2205
        %v2241 = vpop.f32.mrf.mxu0
        %v2242 = vadd.f32 %v2172, %v2241
        %v2243 = vpop.f32.mrf.mxu0
        %v2244 = vpop.f32.mrf.mxu0
        %v2245 = vadd.f32 %v2175, %v2244
        %v2246 = vpop.f32.mrf.mxu0
        %2247 = vdwg.mxu0
        %s2248 = scalar_lea.vmem %s6, 64
        %v2249 = vld [vmem:[%s2248] sm:$0xf]
        %v2250 = vld [vmem:[%s2248 + $0x4] sm:$0xf]
        %v2251 = vld [vmem:[%s2248 + $0x8] sm:$0xf]
        %v2252 = vld [vmem:[%s2248 + $0xc] sm:$0xf]
        %v2253 = vld [vmem:[%s2248 + $0x10] sm:$0xf]
        %v2254 = vld [vmem:[%s2248 + $0x14] sm:$0xf]
        %v2255 = vld [vmem:[%s2248 + $0x18] sm:$0xf]
        %v2256 = vld [vmem:[%s2248 + $0x1c] sm:$0xf]
        %vm2258 = vcmask 1043456
        %v2259 = vrot.slane %v2078, 4
        %v2260 = vrot.slane %v2079, 4
        %v2261 = vsel %vm2258, %v2259, %v2260
        %v2270 = vunpack.c.l.b16 %v2249
        %v2271 = vunpack.c.l.b16 %v2250
        %v2272 = vunpack.c.l.b16 %v2251
        %v2273 = vunpack.c.l.b16 %v2252
        %v2274 = vunpack.c.l.b16 %v2253
        %v2275 = vunpack.c.l.b16 %v2254
        %v2276 = vunpack.c.l.b16 %v2255
        %v2277 = vunpack.c.l.b16 %v2256
        %v2278 = vpack.c.b16 %v2271, %v2270
        %v2279 = vpack.c.b16 %v2273, %v2272
        %v2280 = vpack.c.b16 %v2275, %v2274
        %v2281 = vpack.c.b16 %v2277, %v2276
        %v2287 = vsel %vm1840, %v2261, 0
        %2289 = vmatprep.subr.bf16.mxu0 0
        %2290 = vmatpush1.bf16.msra.mxu0 0
        %2291 = vmatprep.subr.bf16.mxu0 0
        %2292 = vmatpush1.bf16.msra.mxu0 0
        %2293 = vmatprep.subr.bf16.mxu0 0
        %2294 = vmatpush1.bf16.msra.mxu0 0
        %2295 = vmatprep.subr.bf16.mxu0 0
        %2296 = vmatpush1.bf16.msra.mxu0 0
        %2297 = vmatprep.subr.bf16.mxu0 0
        %2298 = vmatpush1.bf16.msra.mxu0 %v2281
        %2299 = vmatprep.subr.bf16.mxu0 0
        %2300 = vmatpush1.bf16.msra.mxu0 %v2280
        %2301 = vmatprep.subr.bf16.mxu0 0
        %2302 = vmatpush1.bf16.msra.mxu0 %v2279
        %2303 = vmatprep.subr.bf16.mxu0 0
        %2304 = vmatpush1.bf16.msra.mxu0 %v2278
        %2305 = vmatprep.subr.bf16.mxu0 0
        %2306 = vmatpush2.bf16.msra.mxu0 0
        %2307 = vmatprep.subr.bf16.mxu0 0
        %2308 = vmatpush2.bf16.msra.mxu0 0
        %2309 = vmatprep.subr.bf16.mxu0 0
        %2310 = vmatpush2.bf16.msra.mxu0 0
        %2311 = vmatprep.subr.bf16.mxu0 0
        %2312 = vmatpush2.bf16.msra.mxu0 0
        %2313 = vmatprep.subr.bf16.mxu0 0
        %2314 = vmatpush2.bf16.msra.mxu0 0
        %2315 = vmatprep.subr.bf16.mxu0 0
        %2316 = vmatpush2.bf16.msra.mxu0 0
        %2317 = vmatprep.subr.bf16.mxu0 0
        %2318 = vmatpush2.bf16.msra.mxu0 0
        %2319 = vmatprep.subr.bf16.mxu0 0
        %2320 = vmatpush2.bf16.msra.mxu0 0
        %2321 = vmatprep.mubr.bf16.mxu0 0
        %2322 = vmatmul.mubr.bf16.gmra.mxu0 %v2287
        %v2323 = vpop.f32.mrf.mxu0
        %v2324 = vadd.f32 0.0, %v2323
        %v2325 = vpop.f32.mrf.mxu0
        %v2326 = vpop.f32.mrf.mxu0
        %v2327 = vadd.f32 0.0, %v2326
        %v2328 = vpop.f32.mrf.mxu0
        %2329 = vdwg.mxu0
        %v2330 = vadd.f32 %v2242, %v2324
        %v2331 = vadd.f32 %v2245, %v2327
        %v2332 = vld [vmem:[%s7] sm:$0x1]
        %v2334 = vlaneseq
        %v2335 = vshrl.u32 %v2334, 7
        %v2336 = vsub.s32 0, %v2335
        %v2337 = vrot.slane %v2332, %v2336
        %v2339 = vadd.f32 %v2330, %v2337
        %v2340 = vadd.f32 %v2331, %v2337
        %v2341 = vmax.f32 %v2339, 0.0
        %v2342 = vmax.f32 %v2340, 0.0
        %v2343 = vld [vmem:[%s8] sm:$0x1]
        %v2345 = vlaneseq
        %v2346 = vshrl.u32 %v2345, 7
        %v2347 = vsub.s32 0, %v2346
        %v2348 = vrot.slane %v2343, %v2347
        %v2350 = vmul.f32 %v2341, %v2348
        %v2351 = vmul.f32 %v2342, %v2348
        %v2352 = vld [vmem:[%s9] sm:$0x1]
        %v2354 = vlaneseq
        %v2355 = vshrl.u32 %v2354, 7
        %v2356 = vsub.s32 0, %v2355
        %v2357 = vrot.slane %v2352, %v2356
        %v2359 = vadd.f32 %v2350, %v2357
        %v2360 = vadd.f32 %v2351, %v2357
        %v2363 = vrot.slane %v2359, 1
        %v2364 = vrot.slane %v2360, 1
        %v2365 = vsel %vm1445, %v2363, %v2364
        %v2369 = vsel %vm1719, %v2363, 0.0
        %v2370 = vsel %vm1720, %v2365, 0.0
        %v2371 = vsel %vm1721, %v2364, 0.0
        %v2372 = vpack.c.bf16 %v2370, %v2369
        %v2373 = vpack.c.bf16 %v2371, %v2371
        %v2374 = vld [vmem:[%s10] sm:$0xf]
        %v2375 = vld [vmem:[%s10 + $0x4] sm:$0xf]
        %v2376 = vld [vmem:[%s10 + $0x8] sm:$0xf]
        %v2377 = vld [vmem:[%s10 + $0xc] sm:$0xf]
        %v2378 = vld [vmem:[%s10 + $0x10] sm:$0xf]
        %v2379 = vld [vmem:[%s10 + $0x14] sm:$0xf]
        %v2380 = vld [vmem:[%s10 + $0x18] sm:$0xf]
        %v2381 = vld [vmem:[%s10 + $0x1c] sm:$0xf]
        %s2382 = scalar_lea.vmem %s10, 32
        %v2383 = vld [vmem:[%s2382] sm:$0xf]
        %v2384 = vld [vmem:[%s2382 + $0x4] sm:$0xf]
        %v2385 = vld [vmem:[%s2382 + $0x8] sm:$0xf]
        %v2386 = vld [vmem:[%s2382 + $0xc] sm:$0xf]
        %v2387 = vld [vmem:[%s2382 + $0x10] sm:$0xf]
        %v2388 = vld [vmem:[%s2382 + $0x14] sm:$0xf]
        %v2389 = vld [vmem:[%s2382 + $0x18] sm:$0xf]
        %v2390 = vld [vmem:[%s2382 + $0x1c] sm:$0xf]
        %v2392 = vrot.slane %v2372, 4
        %v2401 = vunpack.c.l.b16 %v2383
        %v2402 = vunpack.c.l.b16 %v2384
        %v2403 = vunpack.c.l.b16 %v2385
        %v2404 = vunpack.c.l.b16 %v2386
        %v2405 = vunpack.c.l.b16 %v2387
        %v2406 = vunpack.c.l.b16 %v2388
        %v2407 = vunpack.c.l.b16 %v2389
        %v2408 = vunpack.c.l.b16 %v2390
        %v2409 = vpack.c.b16 %v2402, %v2401
        %v2410 = vpack.c.b16 %v2404, %v2403
        %v2411 = vpack.c.b16 %v2406, %v2405
        %v2412 = vpack.c.b16 %v2408, %v2407
        %v2418 = vsel %vm1840, %v2392, 0
        %2420 = vmatprep.subr.bf16.mxu0 0
        %2421 = vmatpush1.bf16.msra.mxu0 0
        %2422 = vmatprep.subr.bf16.mxu0 0
        %2423 = vmatpush1.bf16.msra.mxu0 0
        %2424 = vmatprep.subr.bf16.mxu0 0
        %2425 = vmatpush1.bf16.msra.mxu0 0
        %2426 = vmatprep.subr.bf16.mxu0 0
        %2427 = vmatpush1.bf16.msra.mxu0 0
        %2428 = vmatprep.subr.bf16.mxu0 0
        %2429 = vmatpush1.bf16.msra.mxu0 %v2412
        %2430 = vmatprep.subr.bf16.mxu0 0
        %2431 = vmatpush1.bf16.msra.mxu0 %v2411
        %2432 = vmatprep.subr.bf16.mxu0 0
        %2433 = vmatpush1.bf16.msra.mxu0 %v2410
        %2434 = vmatprep.subr.bf16.mxu0 0
        %2435 = vmatpush1.bf16.msra.mxu0 %v2409
        %2436 = vmatprep.subr.bf16.mxu0 0
        %2437 = vmatpush2.bf16.msra.mxu0 0
        %2438 = vmatprep.subr.bf16.mxu0 0
        %2439 = vmatpush2.bf16.msra.mxu0 0
        %2440 = vmatprep.subr.bf16.mxu0 0
        %2441 = vmatpush2.bf16.msra.mxu0 0
        %2442 = vmatprep.subr.bf16.mxu0 0
        %2443 = vmatpush2.bf16.msra.mxu0 0
        %2444 = vmatprep.subr.bf16.mxu0 0
        %2445 = vmatpush2.bf16.msra.mxu0 0
        %2446 = vmatprep.subr.bf16.mxu0 0
        %2447 = vmatpush2.bf16.msra.mxu0 0
        %2448 = vmatprep.subr.bf16.mxu0 0
        %2449 = vmatpush2.bf16.msra.mxu0 0
        %2450 = vmatprep.subr.bf16.mxu0 0
        %2451 = vmatpush2.bf16.msra.mxu0 0
        %2452 = vmatprep.mubr.bf16.mxu0 0
        %2453 = vmatmul.mubr.bf16.gmra.mxu0 %v2418
        %v2454 = vpop.f32.mrf.mxu0
        %v2455 = vadd.f32 0.0, %v2454
        %v2456 = vpop.f32.mrf.mxu0
        %v2457 = vpop.f32.mrf.mxu0
        %v2458 = vpop.f32.mrf.mxu0
        %2459 = vdwg.mxu0
        %v2461 = vshrl.u32 %v2372, 16
        %v2463 = vrot.slane %v2461, 3
        %v2464 = vshll.u32 %v2372, 16
        %v2466 = vrot.slane %v2464, 4
        %v2467 = vor.u32 %v2463, %v2466
        %v2476 = vunpack.c.l.b16 %v2374
        %v2477 = vunpack.c.l.b16 %v2375
        %v2478 = vunpack.c.l.b16 %v2376
        %v2479 = vunpack.c.l.b16 %v2377
        %v2480 = vunpack.c.l.b16 %v2378
        %v2481 = vunpack.c.l.b16 %v2379
        %v2482 = vunpack.c.l.b16 %v2380
        %v2483 = vunpack.c.l.b16 %v2381
        %v2484 = vpack.c.b16 %v2477, %v2476
        %v2485 = vpack.c.b16 %v2479, %v2478
        %v2486 = vpack.c.b16 %v2481, %v2480
        %v2487 = vpack.c.b16 %v2483, %v2482
        %v2493 = vsel %vm1840, %v2467, 0
        %2495 = vmatprep.subr.bf16.mxu0 0
        %2496 = vmatpush1.bf16.msra.mxu0 0
        %2497 = vmatprep.subr.bf16.mxu0 0
        %2498 = vmatpush1.bf16.msra.mxu0 0
        %2499 = vmatprep.subr.bf16.mxu0 0
        %2500 = vmatpush1.bf16.msra.mxu0 0
        %2501 = vmatprep.subr.bf16.mxu0 0
        %2502 = vmatpush1.bf16.msra.mxu0 0
        %2503 = vmatprep.subr.bf16.mxu0 0
        %2504 = vmatpush1.bf16.msra.mxu0 %v2487
        %2505 = vmatprep.subr.bf16.mxu0 0
        %2506 = vmatpush1.bf16.msra.mxu0 %v2486
        %2507 = vmatprep.subr.bf16.mxu0 0
        %2508 = vmatpush1.bf16.msra.mxu0 %v2485
        %2509 = vmatprep.subr.bf16.mxu0 0
        %2510 = vmatpush1.bf16.msra.mxu0 %v2484
        %2511 = vmatprep.subr.bf16.mxu0 0
        %2512 = vmatpush2.bf16.msra.mxu0 0
        %2513 = vmatprep.subr.bf16.mxu0 0
        %2514 = vmatpush2.bf16.msra.mxu0 0
        %2515 = vmatprep.subr.bf16.mxu0 0
        %2516 = vmatpush2.bf16.msra.mxu0 0
        %2517 = vmatprep.subr.bf16.mxu0 0
        %2518 = vmatpush2.bf16.msra.mxu0 0
        %2519 = vmatprep.subr.bf16.mxu0 0
        %2520 = vmatpush2.bf16.msra.mxu0 0
        %2521 = vmatprep.subr.bf16.mxu0 0
        %2522 = vmatpush2.bf16.msra.mxu0 0
        %2523 = vmatprep.subr.bf16.mxu0 0
        %2524 = vmatpush2.bf16.msra.mxu0 0
        %2525 = vmatprep.subr.bf16.mxu0 0
        %2526 = vmatpush2.bf16.msra.mxu0 0
        %2527 = vmatprep.mubr.bf16.mxu0 0
        %2528 = vmatmul.mubr.bf16.gmra.mxu0 %v2493
        %v2529 = vpop.f32.mrf.mxu0
        %v2530 = vadd.f32 %v2455, %v2529
        %v2531 = vpop.f32.mrf.mxu0
        %v2532 = vpop.f32.mrf.mxu0
        %v2533 = vpop.f32.mrf.mxu0
        %2534 = vdwg.mxu0
        %s2535 = scalar_lea.vmem %s10, 64
        %v2536 = vld [vmem:[%s2535] sm:$0xf]
        %v2537 = vld [vmem:[%s2535 + $0x4] sm:$0xf]
        %v2538 = vld [vmem:[%s2535 + $0x8] sm:$0xf]
        %v2539 = vld [vmem:[%s2535 + $0xc] sm:$0xf]
        %v2540 = vld [vmem:[%s2535 + $0x10] sm:$0xf]
        %v2541 = vld [vmem:[%s2535 + $0x14] sm:$0xf]
        %v2542 = vld [vmem:[%s2535 + $0x18] sm:$0xf]
        %v2543 = vld [vmem:[%s2535 + $0x1c] sm:$0xf]
        %vm2544 = vsmask.f32 3328
        %v2545 = vrot.slane %v2461, 4
        %v2546 = vrot.slane %v2464, 5
        %v2547 = vor.u32 %v2545, %v2546
        %v2549 = vshll.u32 %v2373, 16
        %v2551 = vrot.slane %v2549, 5
        %v2552 = vsel %vm2544, %v2547, %v2551
        %v2561 = vunpack.c.l.b16 %v2536
        %v2562 = vunpack.c.l.b16 %v2537
        %v2563 = vunpack.c.l.b16 %v2538
        %v2564 = vunpack.c.l.b16 %v2539
        %v2565 = vunpack.c.l.b16 %v2540
        %v2566 = vunpack.c.l.b16 %v2541
        %v2567 = vunpack.c.l.b16 %v2542
        %v2568 = vunpack.c.l.b16 %v2543
        %v2569 = vpack.c.b16 %v2562, %v2561
        %v2570 = vpack.c.b16 %v2564, %v2563
        %v2571 = vpack.c.b16 %v2566, %v2565
        %v2572 = vpack.c.b16 %v2568, %v2567
        %v2578 = vsel %vm1840, %v2552, 0
        %2580 = vmatprep.subr.bf16.mxu0 0
        %2581 = vmatpush1.bf16.msra.mxu0 0
        %2582 = vmatprep.subr.bf16.mxu0 0
        %2583 = vmatpush1.bf16.msra.mxu0 0
        %2584 = vmatprep.subr.bf16.mxu0 0
        %2585 = vmatpush1.bf16.msra.mxu0 0
        %2586 = vmatprep.subr.bf16.mxu0 0
        %2587 = vmatpush1.bf16.msra.mxu0 0
        %2588 = vmatprep.subr.bf16.mxu0 0
        %2589 = vmatpush1.bf16.msra.mxu0 %v2572
        %2590 = vmatprep.subr.bf16.mxu0 0
        %2591 = vmatpush1.bf16.msra.mxu0 %v2571
        %2592 = vmatprep.subr.bf16.mxu0 0
        %2593 = vmatpush1.bf16.msra.mxu0 %v2570
        %2594 = vmatprep.subr.bf16.mxu0 0
        %2595 = vmatpush1.bf16.msra.mxu0 %v2569
        %2596 = vmatprep.subr.bf16.mxu0 0
        %2597 = vmatpush2.bf16.msra.mxu0 0
        %2598 = vmatprep.subr.bf16.mxu0 0
        %2599 = vmatpush2.bf16.msra.mxu0 0
        %2600 = vmatprep.subr.bf16.mxu0 0
        %2601 = vmatpush2.bf16.msra.mxu0 0
        %2602 = vmatprep.subr.bf16.mxu0 0
        %2603 = vmatpush2.bf16.msra.mxu0 0
        %2604 = vmatprep.subr.bf16.mxu0 0
        %2605 = vmatpush2.bf16.msra.mxu0 0
        %2606 = vmatprep.subr.bf16.mxu0 0
        %2607 = vmatpush2.bf16.msra.mxu0 0
        %2608 = vmatprep.subr.bf16.mxu0 0
        %2609 = vmatpush2.bf16.msra.mxu0 0
        %2610 = vmatprep.subr.bf16.mxu0 0
        %2611 = vmatpush2.bf16.msra.mxu0 0
        %2612 = vmatprep.mubr.bf16.mxu0 0
        %2613 = vmatmul.mubr.bf16.gmra.mxu0 %v2578
        %v2614 = vpop.f32.mrf.mxu0
        %v2615 = vadd.f32 0.0, %v2614
        %v2616 = vpop.f32.mrf.mxu0
        %v2617 = vpop.f32.mrf.mxu0
        %v2618 = vpop.f32.mrf.mxu0
        %2619 = vdwg.mxu0
        %v2620 = vadd.f32 %v2530, %v2615
        %v2621 = vld [vmem:[%s11] sm:$0x1]
        %v2623 = vlaneseq
        %v2624 = vshrl.u32 %v2623, 7
        %v2625 = vsub.s32 0, %v2624
        %v2626 = vrot.slane %v2621, %v2625
        %v2628 = vadd.f32 %v2620, %v2626
        %v2629 = vmax.f32 %v2628, 0.0
        %v2630 = vpack.c.bf16 %v2629, %v2629
        %vm2631 = vcmask 257024
        %2632 = vst.msk [vmem:[%s455] sm:$0xf] %vm2631, %v2630
        %s2633 = sand.u32 %s314, 1
        %s2634 = scalar_lea.sflag [#allocation3], %s2633
        %s2635 = sand.u32 %s314, 1
        %s2636 = smul.addr %s2635, 4
        %s2637 = scalar_lea.vmem [#allocation2], %s2636
        // Predicated region
        $region69: #{encoder_forward.1} parent=67 // pred_check
          %p2638 = pneg %p324
        $region70: #{encoder_forward.1} parent=67 // pred_check_branch
          %2640 = sbr.rel (%p2638) target = $region72
        $region71: #{encoder_forward.1} parent=67 // pred_region
          %s2642 = ssub.s32 64, 64
          %2643 = vsyncadd %s2634, %s2642
          %s2644 = smul.addr %s30, 2
          %s2645 = sadd.s32 %s31, %s2644
          %s2646 = smul.addr %s2645, 64
          %s2647 = scalar_lea.hbm %s12, %s2646
          %s2649 = sshll.u32 %s2637, 4
          %s2650 = int_to_ptr.vmem [resolvable:$true] %s2649
          %2652 = dma.vmem_to_hbm [thread:$0]  %s2650, 64, %s2647, %s2634
        $region72: #{encoder_forward.1} parent=67 // pred_fallthru
          _
      $region68: #{encoder_forward.1} parent=5 // pred_fallthru
        _
      %p2653 = scmp.le.s32.totalorder 2, %s21
      // Predicated region
      $region73: #{encoder_forward.1} parent=5 // pred_check
        %p2654 = pneg %p2653
      $region74: #{encoder_forward.1} parent=5 // pred_check_branch
        %2656 = sbr.rel (%p2654) target = $region76
      $region75: #{encoder_forward.1} parent=5 // pred_region
        %s2657 = ssub.s32 %s21, 2
        // Predicated region
        $region77: #{encoder_forward.1} parent=75 // pred_check
          %p2658 = pneg %p330
        $region78: #{encoder_forward.1} parent=75 // pred_check_branch
          %2660 = sbr.rel (%p2658) target = $region80
        $region79: #{encoder_forward.1} parent=75 // pred_region
          %s2661 = sand.u32 %s315, 1
          %s2662 = scalar_lea.sflag [#allocation3], %s2661
          %s2663 = sand.u32 %s315, 1
          %s2664 = smul.addr %s2663, 4
          %s2665 = scalar_lea.vmem [#allocation2], %s2664
          %2666 = dma.done %s2662, 64
        $region80: #{encoder_forward.1} parent=75 // pred_fallthru
          _
      $region76: #{encoder_forward.1} parent=5 // pred_fallthru
        _
    $region6: #{encoder_forward.1} parent=1 // loop_footer
      %s25 = sadd.s32 1, %s21
    $region7: #{encoder_forward.1} parent=1 // loop_footer_branch
      %20 = sbr.rel target = $region3
    $region8: #{encoder_forward.1} parent=1 // loop_exit
      _
    %2667 = vsyncpa [#allocation3], 1
    %s2668 = scalar_lea.sflag [#allocation3], 1
    %2669 = vsyncpa %s2668, 1

</llo_original>
